<compile_context>
chip_gen: v7x
topology: tpu7x:2x2x1
jax: 0.10.0
libtpu: 0.0.40
codegen_flags: <defaults>
</compile_context>

<pallas_src>
import functools

import jax
import jax.numpy as jnp
from jax import lax
from jax.experimental import pallas as pl
from jax.experimental.pallas import tpu as pltpu


def _round_up(x, m):
    return (x + m - 1) // m * m


def _pick_tile_m(m, tile_k, tile_n, budget_bytes=12 << 20):
    """Largest row tile whose double-buffered working set fits a conservative
    scoped-VMEM budget (v5e default 16 MiB), preferring >= 2 M tiles so both
    v7x TensorCores get work."""
    for cand in (512, 256, 128):
        need = (2 * cand * tile_k * 2      # patches tile, bf16, double-buffered
                + 2 * tile_k * tile_n * 2  # weight tile,  bf16, double-buffered
                + 2 * cand * tile_n * 2    # y out tile,   bf16, double-buffered
                + cand * tile_n * 4)       # f32 accumulator scratch
        if need <= budget_bytes and (m > cand or cand == 128):
            return cand
    return 128


# ----------------------------- Pallas kernels -------------------------------

def _matmul_stats_kernel(p_ref, w_ref, y_ref, s_ref, ss_ref, acc_ref):
    """acc += P @ W over the K grid axis; at the last K step emit the bf16
    activation tile plus per-(M,N)-tile BatchNorm partial sums (f32).

    No conv bias (cancels exactly under train-mode BN) and no row mask
    (zero-padded patch rows contribute exactly 0 to sum / sum-of-squares)."""
    kk = pl.program_id(2)

    @pl.when(kk == 0)
    def _():
        acc_ref[...] = jnp.zeros_like(acc_ref)

    acc_ref[...] += jnp.dot(p_ref[...], w_ref[...],
                            preferred_element_type=jnp.float32)

    @pl.when(kk == pl.num_programs(2) - 1)
    def _():
        acc = acc_ref[...]
        y_ref[...] = acc.astype(y_ref.dtype)
        s_ref[...] = jnp.sum(acc, axis=0, keepdims=True).reshape(1, 1, -1)
        ss_ref[...] = jnp.sum(acc * acc, axis=0, keepdims=True).reshape(1, 1, -1)


def _bn_lrelu_kernel(y_ref, scale_ref, shift_ref, o_ref, *, slope):
    """Fused BatchNorm apply + LeakyReLU on a lane-dense (TM, Cpad) tile."""
    yn = y_ref[...].astype(jnp.float32) * scale_ref[...] + shift_ref[...]
    o_ref[...] = jnp.maximum(yn, slope * yn).astype(o_ref.dtype)


# ----------------------------- pallas_call glue ------------------------------

def _conv_bn_lrelu(patches, w_mat, c_out, *, eps=1e-5, slope=0.01,
                   out_dtype=jnp.bfloat16):
    """patches (M, K) bf16, w_mat (K, Cout) -> BN(train) + LeakyReLU, (M, Cout)."""
    m_true, k_true = patches.shape
    k_pad = _round_up(k_true, 128)
    c_pad = _round_up(c_out, 128)
    tile_k = min(k_pad, 512)
    tile_n = min(c_pad, 256)
    tile_m = _pick_tile_m(m_true, tile_k, tile_n)
    m_pad = _round_up(m_true, tile_m)
    grid_m = m_pad // tile_m
    grid_n = c_pad // tile_n
    grid_k = k_pad // tile_k

    p = jnp.pad(patches.astype(jnp.bfloat16),
                ((0, m_pad - m_true), (0, k_pad - k_true)))
    w = jnp.pad(w_mat, ((0, k_pad - k_true), (0, c_pad - c_out))).astype(jnp.bfloat16)

    # Pass 1: tiled matmul (M/N parallel, K reduction innermost) + BN partials.
    y, s, ss = pl.pallas_call(
        _matmul_stats_kernel,
        out_shape=(jax.ShapeDtypeStruct((m_pad, c_pad), jnp.bfloat16),
                   jax.ShapeDtypeStruct((grid_m, 1, c_pad), jnp.float32),
                   jax.ShapeDtypeStruct((grid_m, 1, c_pad), jnp.float32)),
        grid=(grid_m, grid_n, grid_k),
        in_specs=[pl.BlockSpec((tile_m, tile_k), lambda i, j, kk: (i, kk)),
                  pl.BlockSpec((tile_k, tile_n), lambda i, j, kk: (kk, j))],
        out_specs=(pl.BlockSpec((tile_m, tile_n), lambda i, j, kk: (i, j)),
                   pl.BlockSpec((1, 1, tile_n), lambda i, j, kk: (i, 0, j)),
                   pl.BlockSpec((1, 1, tile_n), lambda i, j, kk: (i, 0, j))),
        scratch_shapes=[pltpu.VMEM((tile_m, tile_n), jnp.float32)],
        compiler_params=pltpu.CompilerParams(
            dimension_semantics=("parallel", "parallel", "arbitrary")),
    )(p, w)

    # Tiny cross-tile reduction (XLA): global batch statistics.
    # Train-mode BN of a fresh nn.BatchNorm2d: gamma=1, beta=0, biased var.
    cnt = jnp.float32(m_true)
    mean = jnp.sum(s, axis=(0, 1)) / cnt
    var = jnp.maximum(jnp.sum(ss, axis=(0, 1)) / cnt - mean * mean, 0.0)
    inv = lax.rsqrt(var + eps)
    scale = inv.reshape(1, -1)                 # gamma = 1
    shift = (-mean * inv).reshape(1, -1)       # beta  = 0

    # Pass 2: fused normalize + LeakyReLU; bigger row tile (pure elementwise),
    # kept >= 2 tiles when possible so both v7x TensorCores stay busy.
    tile_m2, grid_m2 = tile_m, grid_m
    while grid_m2 % 2 == 0 and grid_m2 > 2 and tile_m2 * 2 <= 2048:
        tile_m2 *= 2
        grid_m2 //= 2

    out = pl.pallas_call(
        functools.partial(_bn_lrelu_kernel, slope=slope),
        out_shape=jax.ShapeDtypeStruct((m_pad, c_pad), out_dtype),
        grid=(grid_m2,),
        in_specs=[pl.BlockSpec((tile_m2, c_pad), lambda i: (i, 0)),
                  pl.BlockSpec((1, c_pad), lambda i: (0, 0)),
                  pl.BlockSpec((1, c_pad), lambda i: (0, 0))],
        out_specs=pl.BlockSpec((tile_m2, c_pad), lambda i: (i, 0)),
        compiler_params=pltpu.CompilerParams(dimension_semantics=("parallel",)),
    )(y, scale, shift)

    return out[:m_true, :c_out]


# ------------------------------ JAX glue ------------------------------------

def _im2col_nhwc(x_nhwc, k, stride):
    """x_nhwc: (N,H,W,C) bf16 -> patches (N*Ho*Wo, k*k*C) bf16, plus (N,Ho,Wo)."""
    n, h, w, c = x_nhwc.shape
    pad = k // 2
    xp = jnp.pad(x_nhwc, ((0, 0), (pad, pad), (pad, pad), (0, 0)))
    ho = (h + 2 * pad - k) // stride + 1
    wo = (w + 2 * pad - k) // stride + 1
    pieces = []
    for di in range(k):
        for dj in range(k):
            pieces.append(
                xp[:, di:di + stride * ho:stride, dj:dj + stride * wo:stride, :]
            )
    # order: (di, dj) outer, channel inner -> K index = (di*k + dj)*C + ci
    p = jnp.stack(pieces, axis=3)            # (N, Ho, Wo, k*k, C) bf16
    p = p.reshape(n * ho * wo, k * k * c)
    return p, (n, ho, wo)


def _weight_to_matmul(w_oikk):
    """PyTorch (Cout, Cin, k, k) -> (k*k*Cin, Cout), matching im2col order."""
    c_out, c_in, k, _ = w_oikk.shape
    return jnp.transpose(w_oikk, (2, 3, 1, 0)).reshape(k * k * c_in, c_out)


def _conv_block(x_nhwc, w_oikk, stride, out_dtype):
    k = w_oikk.shape[-1]
    c_out = w_oikk.shape[0]
    patches, (n, ho, wo) = _im2col_nhwc(x_nhwc, k, stride)
    w_mat = _weight_to_matmul(w_oikk)
    out = _conv_bn_lrelu(patches, w_mat, c_out, out_dtype=out_dtype)
    return out.reshape(n, ho, wo, c_out)


def discrim_block_forward(x_nchw, params):
    """discrim_block: conv(BN, LeakyReLU) -> conv(stride=2, BN, LeakyReLU).

    The conv bias is omitted inside the blocks: with train-mode BatchNorm a
    per-channel constant bias cancels exactly (y - mean(y) is bias-free and
    the variance is unchanged), so the forward output is identical.
    """
    # TODO(synk): BatchNorm running_mean/running_var buffer updates (training
    # side-effects) are not modeled; forward uses batch statistics as PyTorch
    # train-mode does.
    x = jnp.transpose(x_nchw, (0, 2, 3, 1)).astype(jnp.bfloat16)  # NCHW->NHWC + bf16, once
    x = _conv_block(x, params["w1"], stride=1, out_dtype=jnp.bfloat16)
    x = _conv_block(x, params["w2"], stride=2, out_dtype=jnp.float32)
    return jnp.transpose(x, (0, 3, 1, 2))                          # NHWC -> NCHW


def init_params(key, in_feats, out_feats, kernel_size):
    k1, k2 = jax.random.split(key)
    # _conv init: weight ~ N(0, 0.02), bias = 0 (bias kept for parity; it
    # cancels under BatchNorm and is not used in the forward).
    w1 = 0.02 * jax.random.normal(
        k1, (out_feats, in_feats, kernel_size, kernel_size), jnp.float32)
    w2 = 0.02 * jax.random.normal(
        k2, (out_feats, out_feats, kernel_size, kernel_size), jnp.float32)
    b1 = jnp.zeros((out_feats,), jnp.float32)
    b2 = jnp.zeros((out_feats,), jnp.float32)
    return {"w1": w1, "b1": b1, "w2": w2, "b2": b2}


if __name__ == "__main__":
    key = jax.random.PRNGKey(0)
    kx, kp = jax.random.split(key)

    N, C_in, H, W = 2, 4, 16, 16
    C_out, K = 8, 3

    x = jax.random.normal(kx, (N, C_in, H, W), jnp.float32)
    params = init_params(kp, C_in, C_out, K)

    out = jax.jit(discrim_block_forward)(x, params)
    out = jax.block_until_ready(out)
    assert out.shape == (N, C_out, H // 2, W // 2), out.shape
    assert bool(jnp.all(jnp.isfinite(out)))
    print("KERNEL_OK")
</pallas_src>

<mosaic_0001>
module attributes {stable_mosaic.version = 11 : i64} {
  func.func @_matmul_stats_kernel(%arg0: i32, %arg1: i32, %arg2: i32, %arg3: memref<256x128xbf16, #tpu.memory_space<vmem>>, %arg4: memref<128x128xbf16, #tpu.memory_space<vmem>>, %arg5: memref<256x128xbf16, #tpu.memory_space<vmem>>, %arg6: memref<1x1x128xf32, #tpu.memory_space<vmem>>, %arg7: memref<1x1x128xf32, #tpu.memory_space<vmem>>, %arg8: memref<256x128xf32, #tpu.memory_space<vmem>>) attributes {dimension_semantics = [#tpu.dimension_semantics<parallel>, #tpu.dimension_semantics<parallel>, #tpu.dimension_semantics<arbitrary>], iteration_bounds = array<i64: 2, 1, 1>, scalar_prefetch = 0 : i64, scratch_operands = 1 : i64, tpu.core_type = #tpu.core_type<tc>, window_params = [{transform_indices = @transform_0, window_bounds = array<i64: 256, 128>}, {transform_indices = @transform_1, window_bounds = array<i64: 128, 128>}, {transform_indices = @transform_2, window_bounds = array<i64: 256, 128>}, {transform_indices = @transform_3, window_bounds = array<i64: 1, 1, 128>}, {transform_indices = @transform_4, window_bounds = array<i64: 1, 1, 128>}]} {
    %c0_i32 = arith.constant 0 : i32
    %0 = arith.cmpi eq, %arg2, %c0_i32 : i32
    %1 = arith.extui %0 : i1 to i32
    %c0_i32_0 = arith.constant 0 : i32
    %2 = arith.cmpi ne, %1, %c0_i32_0 : i32
    scf.if %2 {
      %cst_10 = arith.constant 0.000000e+00 : f32
      %12 = vector.broadcast %cst_10 : f32 to vector<256x128xf32>
      %c0_11 = arith.constant 0 : index
      %c0_12 = arith.constant 0 : index
      %13 = vector.load %arg8[%c0_11, %c0_12] : memref<256x128xf32, #tpu.memory_space<vmem>>, vector<256x128xf32>
      tpu.vector_store %arg8[%c0_11, %c0_12], %12 {strides = array<i32>} : memref<256x128xf32, #tpu.memory_space<vmem>>, vector<256x128xf32>,
    } else {
    }
    %c0 = arith.constant 0 : index
    %c0_1 = arith.constant 0 : index
    %3 = vector.load %arg8[%c0, %c0_1] : memref<256x128xf32, #tpu.memory_space<vmem>>, vector<256x128xf32>
    %c0_2 = arith.constant 0 : index
    %c0_3 = arith.constant 0 : index
    %4 = vector.load %arg3[%c0_2, %c0_3] : memref<256x128xbf16, #tpu.memory_space<vmem>>, vector<256x128xbf16>
    %c0_4 = arith.constant 0 : index
    %c0_5 = arith.constant 0 : index
    %5 = vector.load %arg4[%c0_4, %c0_5] : memref<128x128xbf16, #tpu.memory_space<vmem>>, vector<128x128xbf16>
    %cst = arith.constant dense<0.000000e+00> : vector<256x128xf32>
    %6 = tpu.matmul %4, %5, %cst {dimension_numbers = #tpu.dot_dimension_numbers<[1], [0], [0], [1], [0, 0, 1, 1], [], []>} : vector<256x128xbf16>, vector<128x128xbf16>, vector<256x128xf32> -> vector<256x128xf32>
    %7 = arith.addf %3, %6 : vector<256x128xf32>
    %c0_6 = arith.constant 0 : index
    %c0_7 = arith.constant 0 : index
    %8 = vector.load %arg8[%c0_6, %c0_7] : memref<256x128xf32, #tpu.memory_space<vmem>>, vector<256x128xf32>
    tpu.vector_store %arg8[%c0_6, %c0_7], %7 {strides = array<i32>} : memref<256x128xf32, #tpu.memory_space<vmem>>, vector<256x128xf32>,
    %c0_i32_8 = arith.constant 0 : i32
    %9 = arith.cmpi eq, %arg2, %c0_i32_8 : i32
    %10 = arith.extui %9 : i1 to i32
    %c0_i32_9 = arith.constant 0 : i32
    %11 = arith.cmpi ne, %10, %c0_i32_9 : i32
    scf.if %11 {
      %c0_10 = arith.constant 0 : index
      %c0_11 = arith.constant 0 : index
      %12 = vector.load %arg8[%c0_10, %c0_11] : memref<256x128xf32, #tpu.memory_space<vmem>>, vector<256x128xf32>
      %13 = arith.truncf %12 : vector<256x128xf32> to vector<256x128xbf16>
      %c0_12 = arith.constant 0 : index
      %c0_13 = arith.constant 0 : index
      %14 = vector.load %arg5[%c0_12, %c0_13] : memref<256x128xbf16, #tpu.memory_space<vmem>>, vector<256x128xbf16>
      tpu.vector_store %arg5[%c0_12, %c0_13], %13 {strides = array<i32>} : memref<256x128xbf16, #tpu.memory_space<vmem>>, vector<256x128xbf16>,
      %cst_14 = arith.constant dense<0.000000e+00> : vector<128xf32>
      %15 = vector.multi_reduction <add>, %12, %cst_14 [0] : vector<256x128xf32> to vector<128xf32>
      %16 = vector.shape_cast %15 : vector<128xf32> to vector<1x128xf32>
      %17 = vector.shape_cast %16 : vector<1x128xf32> to vector<1x1x128xf32>
      %c0_15 = arith.constant 0 : index
      %c0_16 = arith.constant 0 : index
      %c0_17 = arith.constant 0 : index
      %18 = vector.load %arg6[%c0_15, %c0_16, %c0_17] : memref<1x1x128xf32, #tpu.memory_space<vmem>>, vector<1x1x128xf32>
      tpu.vector_store %arg6[%c0_15, %c0_16, %c0_17], %17 {strides = array<i32>} : memref<1x1x128xf32, #tpu.memory_space<vmem>>, vector<1x1x128xf32>,
      %19 = arith.mulf %12, %12 : vector<256x128xf32>
      %cst_18 = arith.constant dense<0.000000e+00> : vector<128xf32>
      %20 = vector.multi_reduction <add>, %19, %cst_18 [0] : vector<256x128xf32> to vector<128xf32>
      %21 = vector.shape_cast %20 : vector<128xf32> to vector<1x128xf32>
      %22 = vector.shape_cast %21 : vector<1x128xf32> to vector<1x1x128xf32>
      %c0_19 = arith.constant 0 : index
      %c0_20 = arith.constant 0 : index
      %c0_21 = arith.constant 0 : index
      %23 = vector.load %arg7[%c0_19, %c0_20, %c0_21] : memref<1x1x128xf32, #tpu.memory_space<vmem>>, vector<1x1x128xf32>
      tpu.vector_store %arg7[%c0_19, %c0_20, %c0_21], %22 {strides = array<i32>} : memref<1x1x128xf32, #tpu.memory_space<vmem>>, vector<1x1x128xf32>,
    } else {
    }
    return
  }
  func.func @transform_0(%arg0: i32, %arg1: i32, %arg2: i32) -> (i32, i32) {
    %c0_i32 = arith.constant 0 : i32
    return %arg0, %arg2 : i32, i32
  }
  func.func @transform_1(%arg0: i32, %arg1: i32, %arg2: i32) -> (i32, i32) {
    %c0_i32 = arith.constant 0 : i32
    return %arg2, %arg1 : i32, i32
  }
  func.func @transform_2(%arg0: i32, %arg1: i32, %arg2: i32) -> (i32, i32) {
    %c0_i32 = arith.constant 0 : i32
    return %arg0, %arg1 : i32, i32
  }
  func.func @transform_3(%arg0: i32, %arg1: i32, %arg2: i32) -> (i32, i32, i32) {
    %c0_i32 = arith.constant 0 : i32
    %c0_i32_0 = arith.constant 0 : i32
    return %arg0, %c0_i32, %arg1 : i32, i32, i32
  }
  func.func @transform_4(%arg0: i32, %arg1: i32, %arg2: i32) -> (i32, i32, i32) {
    %c0_i32 = arith.constant 0 : i32
    %c0_i32_0 = arith.constant 0 : i32
    return %arg0, %c0_i32, %arg1 : i32, i32, i32
  }
}

module attributes {stable_mosaic.version = 11 : i64} {
  func.func @_bn_lrelu_kernel(%arg0: i32, %arg1: memref<256x128xbf16, #tpu.memory_space<vmem>>, %arg2: memref<1x128xf32, #tpu.memory_space<vmem>>, %arg3: memref<1x128xf32, #tpu.memory_space<vmem>>, %arg4: memref<256x128xbf16, #tpu.memory_space<vmem>>) attributes {dimension_semantics = [#tpu.dimension_semantics<parallel>], iteration_bounds = array<i64: 2>, scalar_prefetch = 0 : i64, scratch_operands = 0 : i64, tpu.core_type = #tpu.core_type<tc>, window_params = [{transform_indices = @transform_0, window_bounds = array<i64: 256, 128>}, {pipeline_mode = #tpu.pipeline_mode<synchronous>, transform_indices = @transform_1, window_bounds = array<i64: 1, 128>}, {pipeline_mode = #tpu.pipeline_mode<synchronous>, transform_indices = @transform_2, window_bounds = array<i64: 1, 128>}, {transform_indices = @transform_3, window_bounds = array<i64: 256, 128>}]} {
    %c0 = arith.constant 0 : index
    %c0_0 = arith.constant 0 : index
    %0 = vector.load %arg1[%c0, %c0_0] : memref<256x128xbf16, #tpu.memory_space<vmem>>, vector<256x128xbf16>
    %1 = arith.extf %0 : vector<256x128xbf16> to vector<256x128xf32>
    %c0_1 = arith.constant 0 : index
    %c0_2 = arith.constant 0 : index
    %2 = vector.load %arg2[%c0_1, %c0_2] : memref<1x128xf32, #tpu.memory_space<vmem>>, vector<1x128xf32>
    %3 = vector.broadcast %2 : vector<1x128xf32> to vector<256x128xf32>
    %4 = arith.mulf %1, %3 : vector<256x128xf32>
    %c0_3 = arith.constant 0 : index
    %c0_4 = arith.constant 0 : index
    %5 = vector.load %arg3[%c0_3, %c0_4] : memref<1x128xf32, #tpu.memory_space<vmem>>, vector<1x128xf32>
    %6 = vector.broadcast %5 : vector<1x128xf32> to vector<256x128xf32>
    %7 = arith.addf %4, %6 : vector<256x128xf32>
    %cst = arith.constant 0.00999999977 : f32
    %8 = vector.broadcast %cst : f32 to vector<256x128xf32>
    %9 = arith.mulf %8, %7 : vector<256x128xf32>
    %10 = arith.maximumf %7, %9 : vector<256x128xf32>
    %11 = arith.truncf %10 : vector<256x128xf32> to vector<256x128xbf16>
    %c0_5 = arith.constant 0 : index
    %c0_6 = arith.constant 0 : index
    %12 = vector.load %arg4[%c0_5, %c0_6] : memref<256x128xbf16, #tpu.memory_space<vmem>>, vector<256x128xbf16>
    tpu.vector_store %arg4[%c0_5, %c0_6], %11 {strides = array<i32>} : memref<256x128xbf16, #tpu.memory_space<vmem>>, vector<256x128xbf16>,
    return
  }
  func.func @transform_0(%arg0: i32) -> (i32, i32) {
    %c0_i32 = arith.constant 0 : i32
    %c0_i32_0 = arith.constant 0 : i32
    return %arg0, %c0_i32 : i32, i32
  }
  func.func @transform_1(%arg0: i32) -> (i32, i32) {
    %c0_i32 = arith.constant 0 : i32
    %c0_i32_0 = arith.constant 0 : i32
    %c0_i32_1 = arith.constant 0 : i32
    return %c0_i32, %c0_i32_0 : i32, i32
  }
  func.func @transform_2(%arg0: i32) -> (i32, i32) {
    %c0_i32 = arith.constant 0 : i32
    %c0_i32_0 = arith.constant 0 : i32
    %c0_i32_1 = arith.constant 0 : i32
    return %c0_i32, %c0_i32_0 : i32, i32
  }
  func.func @transform_3(%arg0: i32) -> (i32, i32) {
    %c0_i32 = arith.constant 0 : i32
    %c0_i32_0 = arith.constant 0 : i32
    return %arg0, %c0_i32 : i32, i32
  }
}

module attributes {stable_mosaic.version = 11 : i64} {
  func.func @_matmul_stats_kernel(%arg0: i32, %arg1: i32, %arg2: i32, %arg3: memref<128x128xbf16, #tpu.memory_space<vmem>>, %arg4: memref<128x128xbf16, #tpu.memory_space<vmem>>, %arg5: memref<128x128xbf16, #tpu.memory_space<vmem>>, %arg6: memref<1x1x128xf32, #tpu.memory_space<vmem>>, %arg7: memref<1x1x128xf32, #tpu.memory_space<vmem>>, %arg8: memref<128x128xf32, #tpu.memory_space<vmem>>) attributes {dimension_semantics = [#tpu.dimension_semantics<parallel>, #tpu.dimension_semantics<parallel>, #tpu.dimension_semantics<arbitrary>], iteration_bounds = array<i64: 1, 1, 1>, scalar_prefetch = 0 : i64, scratch_operands = 1 : i64, tpu.core_type = #tpu.core_type<tc>, window_params = [{transform_indices = @transform_0, window_bounds = array<i64: 128, 128>}, {transform_indices = @transform_1, window_bounds = array<i64: 128, 128>}, {transform_indices = @transform_2, window_bounds = array<i64: 128, 128>}, {transform_indices = @transform_3, window_bounds = array<i64: 1, 1, 128>}, {transform_indices = @transform_4, window_bounds = array<i64: 1, 1, 128>}]} {
    %c0_i32 = arith.constant 0 : i32
    %0 = arith.cmpi eq, %arg2, %c0_i32 : i32
    %1 = arith.extui %0 : i1 to i32
    %c0_i32_0 = arith.constant 0 : i32
    %2 = arith.cmpi ne, %1, %c0_i32_0 : i32
    scf.if %2 {
      %cst_10 = arith.constant 0.000000e+00 : f32
      %12 = vector.broadcast %cst_10 : f32 to vector<128x128xf32>
      %c0_11 = arith.constant 0 : index
      %c0_12 = arith.constant 0 : index
      %13 = vector.load %arg8[%c0_11, %c0_12] : memref<128x128xf32, #tpu.memory_space<vmem>>, vector<128x128xf32>
      tpu.vector_store %arg8[%c0_11, %c0_12], %12 {strides = array<i32>} : memref<128x128xf32, #tpu.memory_space<vmem>>, vector<128x128xf32>,
    } else {
    }
    %c0 = arith.constant 0 : index
    %c0_1 = arith.constant 0 : index
    %3 = vector.load %arg8[%c0, %c0_1] : memref<128x128xf32, #tpu.memory_space<vmem>>, vector<128x128xf32>
    %c0_2 = arith.constant 0 : index
    %c0_3 = arith.constant 0 : index
    %4 = vector.load %arg3[%c0_2, %c0_3] : memref<128x128xbf16, #tpu.memory_space<vmem>>, vector<128x128xbf16>
    %c0_4 = arith.constant 0 : index
    %c0_5 = arith.constant 0 : index
    %5 = vector.load %arg4[%c0_4, %c0_5] : memref<128x128xbf16, #tpu.memory_space<vmem>>, vector<128x128xbf16>
    %cst = arith.constant dense<0.000000e+00> : vector<128x128xf32>
    %6 = tpu.matmul %4, %5, %cst {dimension_numbers = #tpu.dot_dimension_numbers<[1], [0], [0], [1], [0, 0, 1, 1], [], []>} : vector<128x128xbf16>, vector<128x128xbf16>, vector<128x128xf32> -> vector<128x128xf32>
    %7 = arith.addf %3, %6 : vector<128x128xf32>
    %c0_6 = arith.constant 0 : index
    %c0_7 = arith.constant 0 : index
    %8 = vector.load %arg8[%c0_6, %c0_7] : memref<128x128xf32, #tpu.memory_space<vmem>>, vector<128x128xf32>
    tpu.vector_store %arg8[%c0_6, %c0_7], %7 {strides = array<i32>} : memref<128x128xf32, #tpu.memory_space<vmem>>, vector<128x128xf32>,
    %c0_i32_8 = arith.constant 0 : i32
    %9 = arith.cmpi eq, %arg2, %c0_i32_8 : i32
    %10 = arith.extui %9 : i1 to i32
    %c0_i32_9 = arith.constant 0 : i32
    %11 = arith.cmpi ne, %10, %c0_i32_9 : i32
    scf.if %11 {
      %c0_10 = arith.constant 0 : index
      %c0_11 = arith.constant 0 : index
      %12 = vector.load %arg8[%c0_10, %c0_11] : memref<128x128xf32, #tpu.memory_space<vmem>>, vector<128x128xf32>
      %13 = arith.truncf %12 : vector<128x128xf32> to vector<128x128xbf16>
      %c0_12 = arith.constant 0 : index
      %c0_13 = arith.constant 0 : index
      %14 = vector.load %arg5[%c0_12, %c0_13] : memref<128x128xbf16, #tpu.memory_space<vmem>>, vector<128x128xbf16>
      tpu.vector_store %arg5[%c0_12, %c0_13], %13 {strides = array<i32>} : memref<128x128xbf16, #tpu.memory_space<vmem>>, vector<128x128xbf16>,
      %cst_14 = arith.constant dense<0.000000e+00> : vector<128xf32>
      %15 = vector.multi_reduction <add>, %12, %cst_14 [0] : vector<128x128xf32> to vector<128xf32>
      %16 = vector.shape_cast %15 : vector<128xf32> to vector<1x128xf32>
      %17 = vector.shape_cast %16 : vector<1x128xf32> to vector<1x1x128xf32>
      %c0_15 = arith.constant 0 : index
      %c0_16 = arith.constant 0 : index
      %c0_17 = arith.constant 0 : index
      %18 = vector.load %arg6[%c0_15, %c0_16, %c0_17] : memref<1x1x128xf32, #tpu.memory_space<vmem>>, vector<1x1x128xf32>
      tpu.vector_store %arg6[%c0_15, %c0_16, %c0_17], %17 {strides = array<i32>} : memref<1x1x128xf32, #tpu.memory_space<vmem>>, vector<1x1x128xf32>,
      %19 = arith.mulf %12, %12 : vector<128x128xf32>
      %cst_18 = arith.constant dense<0.000000e+00> : vector<128xf32>
      %20 = vector.multi_reduction <add>, %19, %cst_18 [0] : vector<128x128xf32> to vector<128xf32>
      %21 = vector.shape_cast %20 : vector<128xf32> to vector<1x128xf32>
      %22 = vector.shape_cast %21 : vector<1x128xf32> to vector<1x1x128xf32>
      %c0_19 = arith.constant 0 : index
      %c0_20 = arith.constant 0 : index
      %c0_21 = arith.constant 0 : index
      %23 = vector.load %arg7[%c0_19, %c0_20, %c0_21] : memref<1x1x128xf32, #tpu.memory_space<vmem>>, vector<1x1x128xf32>
      tpu.vector_store %arg7[%c0_19, %c0_20, %c0_21], %22 {strides = array<i32>} : memref<1x1x128xf32, #tpu.memory_space<vmem>>, vector<1x1x128xf32>,
    } else {
    }
    return
  }
  func.func @transform_0(%arg0: i32, %arg1: i32, %arg2: i32) -> (i32, i32) {
    %c0_i32 = arith.constant 0 : i32
    return %arg0, %arg2 : i32, i32
  }
  func.func @transform_1(%arg0: i32, %arg1: i32, %arg2: i32) -> (i32, i32) {
    %c0_i32 = arith.constant 0 : i32
    return %arg2, %arg1 : i32, i32
  }
  func.func @transform_2(%arg0: i32, %arg1: i32, %arg2: i32) -> (i32, i32) {
    %c0_i32 = arith.constant 0 : i32
    return %arg0, %arg1 : i32, i32
  }
  func.func @transform_3(%arg0: i32, %arg1: i32, %arg2: i32) -> (i32, i32, i32) {
    %c0_i32 = arith.constant 0 : i32
    %c0_i32_0 = arith.constant 0 : i32
    return %arg0, %c0_i32, %arg1 : i32, i32, i32
  }
  func.func @transform_4(%arg0: i32, %arg1: i32, %arg2: i32) -> (i32, i32, i32) {
    %c0_i32 = arith.constant 0 : i32
    %c0_i32_0 = arith.constant 0 : i32
    return %arg0, %c0_i32, %arg1 : i32, i32, i32
  }
}

module attributes {stable_mosaic.version = 11 : i64} {
  func.func @_bn_lrelu_kernel(%arg0: i32, %arg1: memref<128x128xbf16, #tpu.memory_space<vmem>>, %arg2: memref<1x128xf32, #tpu.memory_space<vmem>>, %arg3: memref<1x128xf32, #tpu.memory_space<vmem>>, %arg4: memref<128x128xf32, #tpu.memory_space<vmem>>) attributes {dimension_semantics = [#tpu.dimension_semantics<parallel>], iteration_bounds = array<i64: 1>, scalar_prefetch = 0 : i64, scratch_operands = 0 : i64, tpu.core_type = #tpu.core_type<tc>, window_params = [{transform_indices = @transform_0, window_bounds = array<i64: 128, 128>}, {pipeline_mode = #tpu.pipeline_mode<synchronous>, transform_indices = @transform_1, window_bounds = array<i64: 1, 128>}, {pipeline_mode = #tpu.pipeline_mode<synchronous>, transform_indices = @transform_2, window_bounds = array<i64: 1, 128>}, {transform_indices = @transform_3, window_bounds = array<i64: 128, 128>}]} {
    %c0 = arith.constant 0 : index
    %c0_0 = arith.constant 0 : index
    %0 = vector.load %arg1[%c0, %c0_0] : memref<128x128xbf16, #tpu.memory_space<vmem>>, vector<128x128xbf16>
    %1 = arith.extf %0 : vector<128x128xbf16> to vector<128x128xf32>
    %c0_1 = arith.constant 0 : index
    %c0_2 = arith.constant 0 : index
    %2 = vector.load %arg2[%c0_1, %c0_2] : memref<1x128xf32, #tpu.memory_space<vmem>>, vector<1x128xf32>
    %3 = vector.broadcast %2 : vector<1x128xf32> to vector<128x128xf32>
    %4 = arith.mulf %1, %3 : vector<128x128xf32>
    %c0_3 = arith.constant 0 : index
    %c0_4 = arith.constant 0 : index
    %5 = vector.load %arg3[%c0_3, %c0_4] : memref<1x128xf32, #tpu.memory_space<vmem>>, vector<1x128xf32>
    %6 = vector.broadcast %5 : vector<1x128xf32> to vector<128x128xf32>
    %7 = arith.addf %4, %6 : vector<128x128xf32>
    %cst = arith.constant 0.00999999977 : f32
    %8 = vector.broadcast %cst : f32 to vector<128x128xf32>
    %9 = arith.mulf %8, %7 : vector<128x128xf32>
    %10 = arith.maximumf %7, %9 : vector<128x128xf32>
    %c0_5 = arith.constant 0 : index
    %c0_6 = arith.constant 0 : index
    %11 = vector.load %arg4[%c0_5, %c0_6] : memref<128x128xf32, #tpu.memory_space<vmem>>, vector<128x128xf32>
    tpu.vector_store %arg4[%c0_5, %c0_6], %10 {strides = array<i32>} : memref<128x128xf32, #tpu.memory_space<vmem>>, vector<128x128xf32>,
    return
  }
  func.func @transform_0(%arg0: i32) -> (i32, i32) {
    %c0_i32 = arith.constant 0 : i32
    %c0_i32_0 = arith.constant 0 : i32
    return %arg0, %c0_i32 : i32, i32
  }
  func.func @transform_1(%arg0: i32) -> (i32, i32) {
    %c0_i32 = arith.constant 0 : i32
    %c0_i32_0 = arith.constant 0 : i32
    %c0_i32_1 = arith.constant 0 : i32
    return %c0_i32, %c0_i32_0 : i32, i32
  }
  func.func @transform_2(%arg0: i32) -> (i32, i32) {
    %c0_i32 = arith.constant 0 : i32
    %c0_i32_0 = arith.constant 0 : i32
    %c0_i32_1 = arith.constant 0 : i32
    return %c0_i32, %c0_i32_0 : i32, i32
  }
  func.func @transform_3(%arg0: i32) -> (i32, i32) {
    %c0_i32 = arith.constant 0 : i32
    %c0_i32_0 = arith.constant 0 : i32
    return %arg0, %c0_i32 : i32, i32
  }
}

</mosaic_0001>

<llo_original>
// kernel: discrim_block_forward.5
$region0: #{discrim_block_forward.5}
  #allocation0 [shape = 'u32[]', space=smem, size = 0x4, offset = 0x4, fixed_abs, tag = 'smem constant byte address 0x4 - core index']
  #allocation1 [shape = 'u32[144,128]{1,0:T(1,128)}', space=vmem, size = 0x12000, scoped, tag = 'internal scratch']
  %s0 = inlined_call_operand.vmem [shape: bf16[512,128], index: 0, kind: input, shape index: {}]
  %s1 = inlined_call_operand.vmem [shape: f32[1,128], index: 1, kind: input, shape index: {}]
  %s2 = inlined_call_operand.vmem [shape: f32[1,128], index: 2, kind: input, shape index: {}]
  %s3 = inlined_call_operand.vmem [shape: bf16[512,128], index: 3, kind: output, shape index: {}]
  %s4 = sld [smem:[#allocation0]]
  $region45: #{discrim_block_forward.5} parent=0
    _
  %s6 = ssub.s32 1, %s4
  %s7 = scalar_select 0, %s6, %s4
  loop: start=0, step=1, limit=4
  $region2: #{discrim_block_forward.5} parent=0 // loop_pre_header
    _
  $region3: #{discrim_block_forward.5} parent=0 // loop_header
    %s9 = sphi 0, %s13
    %p10 = scmp.ge.s32.totalorder %s9, 4
    %s19 = sphi 0, %s21
    %s22 = sphi 0, %s19
    %s23 = sphi 0, %s22
    %s39 = sphi 0, %s23
    %s43 = sphi 0, %s43
    %s45 = sphi 0, %s43
    %s46 = sphi 0, %s45
    %s60 = sphi 0, %s46
    %s64 = sphi 0, %s64
    %s66 = sphi 0, %s64
    %s67 = sphi 0, %s66
    %s81 = sphi 0, %s67
    %s87 = sphi 0, %s89
    %s90 = sphi 0, %s87
    %s91 = sphi 0, %s90
    %s107 = sphi 0, %s91
  $region4: #{discrim_block_forward.5} parent=0 // loop_header_branch
    %12 = sbr.rel (%p10) target = $region8
  $region5: #{discrim_block_forward.5} parent=0 // loop_body
    %s14 = ssub.s32 %s9, 1
    %s15 = ssub.s32 %s9, 2
    %s16 = sadd.s32 %s9, 1
    %s17 = ssub.s32 %s9, %s16
    %p18 = scmp.eq.s32.totalorder %s17, 0
    %s20 = sadd.s32 %s19, 1
    %s21 = scalar_select %p18, %s19, %s20
    %p24 = pneg %p18
    %p25 = scmp.eq.s32.totalorder %s9, 1
    %p26 = por %p24, %p25
    %p27 = scmp.ne.s32.totalorder %s19, %s22
    %p28 = scmp.eq.s32.totalorder %s9, 0
    %p29 = por %p27, %p28
    %p30 = scmp.ne.s32.totalorder %s19, %s22
    %p31 = scmp.eq.s32.totalorder %s14, 1
    %p32 = por %p30, %p31
    %p33 = scmp.ne.s32.totalorder %s22, %s23
    %p34 = scmp.eq.s32.totalorder %s14, 0
    %p35 = por %p33, %p34
    %p36 = scmp.ne.s32.totalorder %s22, %s23
    %p37 = scmp.eq.s32.totalorder %s15, 1
    %p38 = por %p36, %p37
    %p40 = scmp.ne.s32.totalorder %s23, %s39
    %p41 = scmp.eq.s32.totalorder %s15, 0
    %p42 = por %p40, %p41
    %s44 = sadd.s32 %s43, 1
    %p47 = scmp.eq.s32.totalorder %s9, 1
    %p48 = scmp.ne.s32.totalorder %s43, %s45
    %p49 = scmp.eq.s32.totalorder %s9, 0
    %p50 = por %p48, %p49
    %p51 = scmp.ne.s32.totalorder %s43, %s45
    %p52 = scmp.eq.s32.totalorder %s14, 1
    %p53 = por %p51, %p52
    %p54 = scmp.ne.s32.totalorder %s45, %s46
    %p55 = scmp.eq.s32.totalorder %s14, 0
    %p56 = por %p54, %p55
    %p57 = scmp.ne.s32.totalorder %s45, %s46
    %p58 = scmp.eq.s32.totalorder %s15, 1
    %p59 = por %p57, %p58
    %p61 = scmp.ne.s32.totalorder %s46, %s60
    %p62 = scmp.eq.s32.totalorder %s15, 0
    %p63 = por %p61, %p62
    %s65 = sadd.s32 %s64, 1
    %p68 = scmp.eq.s32.totalorder %s9, 1
    %p69 = scmp.ne.s32.totalorder %s64, %s66
    %p70 = scmp.eq.s32.totalorder %s9, 0
    %p71 = por %p69, %p70
    %p72 = scmp.ne.s32.totalorder %s64, %s66
    %p73 = scmp.eq.s32.totalorder %s14, 1
    %p74 = por %p72, %p73
    %p75 = scmp.ne.s32.totalorder %s66, %s67
    %p76 = scmp.eq.s32.totalorder %s14, 0
    %p77 = por %p75, %p76
    %p78 = scmp.ne.s32.totalorder %s66, %s67
    %p79 = scmp.eq.s32.totalorder %s15, 1
    %p80 = por %p78, %p79
    %p82 = scmp.ne.s32.totalorder %s67, %s81
    %p83 = scmp.eq.s32.totalorder %s15, 0
    %p84 = por %p82, %p83
    %s85 = ssub.s32 %s9, %s16
    %p86 = scmp.eq.s32.totalorder %s85, 0
    %s88 = sadd.s32 %s87, 1
    %s89 = scalar_select %p86, %s87, %s88
    %p92 = pneg %p86
    %p93 = scmp.eq.s32.totalorder %s9, 1
    %p94 = por %p92, %p93
    %p95 = scmp.ne.s32.totalorder %s87, %s90
    %p96 = scmp.eq.s32.totalorder %s9, 0
    %p97 = por %p95, %p96
    %p98 = scmp.ne.s32.totalorder %s87, %s90
    %p99 = scmp.eq.s32.totalorder %s14, 1
    %p100 = por %p98, %p99
    %p101 = scmp.ne.s32.totalorder %s90, %s91
    %p102 = scmp.eq.s32.totalorder %s14, 0
    %p103 = por %p101, %p102
    %p104 = scmp.ne.s32.totalorder %s90, %s91
    %p105 = scmp.eq.s32.totalorder %s15, 1
    %p106 = por %p104, %p105
    %p108 = scmp.ne.s32.totalorder %s91, %s107
    %p109 = scmp.eq.s32.totalorder %s15, 0
    %p110 = por %p108, %p109
    %p111 = scmp.le.s32.totalorder 1, %s9
    %p112 = scmp.lt.s32.totalorder %s9, 3
    %p113 = pnand %p111, %p112
    %p114 = pneg %p113
    // Predicated region
    $region9: #{discrim_block_forward.5} parent=5 // pred_check
      _
    $region10: #{discrim_block_forward.5} parent=5 // pred_check_branch
      %116 = sbr.rel (%p113) target = $region12
    $region11: #{discrim_block_forward.5} parent=5 // pred_region
      %s117 = ssub.s32 %s9, 1
      // Predicated region
      $region13: #{discrim_block_forward.5} parent=11 // pred_check
        %p118 = pneg %p56
      $region14: #{discrim_block_forward.5} parent=11 // pred_check_branch
        %120 = sbr.rel (%p118) target = $region16
      $region15: #{discrim_block_forward.5} parent=11 // pred_region
        _
      $region16: #{discrim_block_forward.5} parent=11 // pred_fallthru
        _
      // Predicated region
      $region17: #{discrim_block_forward.5} parent=11 // pred_check
        %p121 = pneg %p77
      $region18: #{discrim_block_forward.5} parent=11 // pred_check_branch
        %123 = sbr.rel (%p121) target = $region20
      $region19: #{discrim_block_forward.5} parent=11 // pred_region
        _
      $region20: #{discrim_block_forward.5} parent=11 // pred_fallthru
        _
    $region12: #{discrim_block_forward.5} parent=5 // pred_fallthru
      _
    %p124 = scmp.lt.s32.totalorder %s9, 2
    // Predicated region
    $region21: #{discrim_block_forward.5} parent=5 // pred_check
      %p125 = pneg %p124
    $region22: #{discrim_block_forward.5} parent=5 // pred_check_branch
      %127 = sbr.rel (%p125) target = $region24
    $region23: #{discrim_block_forward.5} parent=5 // pred_region
      // Predicated region
      $region25: #{discrim_block_forward.5} parent=23 // pred_check
        %p128 = pneg %p29
      $region26: #{discrim_block_forward.5} parent=23 // pred_check_branch
        %130 = sbr.rel (%p128) target = $region28
      $region27: #{discrim_block_forward.5} parent=23 // pred_region
        %s131 = smul.u32 32, %s9
        %p132 = scmp.lt.s32.totalorder %s131, 63
        %s133 = scalar_select %p132, %s131, 63
        %s134 = smul.addr %s133, 4
        %s135 = scalar_lea.vmem %s0, %s134
        %s136 = smul.u32 32, %s9
      $region28: #{discrim_block_forward.5} parent=23 // pred_fallthru
        _
    $region24: #{discrim_block_forward.5} parent=5 // pred_fallthru
      _
    %p137 = scmp.le.s32.totalorder 1, %s9
    %p138 = scmp.lt.s32.totalorder %s9, 3
    %p139 = pnand %p137, %p138
    %p140 = pneg %p139
    // Predicated region
    $region29: #{discrim_block_forward.5} parent=5 // pred_check
      _
    $region30: #{discrim_block_forward.5} parent=5 // pred_check_branch
      %142 = sbr.rel (%p139) target = $region32
    $region31: #{discrim_block_forward.5} parent=5 // pred_region
      %s143 = ssub.s32 %s9, 1
      %s144 = smul.u32 32, %s14
      %p145 = scmp.lt.s32.totalorder %s144, 63
      %s146 = scalar_select %p145, %s144, 63
      %s147 = smul.addr %s146, 4
      %s148 = scalar_lea.vmem %s0, %s147
      %p149 = pneg %p35
      %p150 = pneg %p32
      %p151 = pneg %p56
      %p152 = pneg %p53
      %p153 = pneg %p77
      %p154 = pneg %p74
      %p155 = pneg %p103
      %p156 = pneg %p100
      %s157 = smul.u32 32, %s14
      %p158 = scmp.lt.s32.totalorder %s157, 63
      %s159 = scalar_select %p158, %s157, 63
      %s160 = smul.addr %s159, 4
      %s161 = scalar_lea.vmem %s3, %s160
      %s162 = smul.u32 32, %s14
      %p163 = scmp.lt.s32.totalorder %s162, 63
      %s164 = scalar_select %p163, %s162, 63
      %s165 = smul.addr %s164, 4
      %s166 = scalar_lea.vmem %s0, %s165
      %s167 = smul.u32 32, %s14
      %s168 = smul.u32 32, %s14
      %p169 = scmp.lt.s32.totalorder %s168, 63
      %s170 = scalar_select %p169, %s168, 63
      %s171 = smul.addr %s170, 4
      %s172 = scalar_lea.vmem %s3, %s171
      %s173 = smul.u32 32, %s14
      %v174 = vld [vmem:[%s166] sm:$0xf]
      %v175 = vld [vmem:[%s166 + $0x4] sm:$0xf]
      %v176 = vld [vmem:[%s166 + $0x8] sm:$0xf]
      %v177 = vld [vmem:[%s166 + $0xc] sm:$0xf]
      %v178 = vld [vmem:[%s166 + $0x10] sm:$0xf]
      %v179 = vld [vmem:[%s166 + $0x14] sm:$0xf]
      %v180 = vld [vmem:[%s166 + $0x18] sm:$0xf]
      %v181 = vld [vmem:[%s166 + $0x1c] sm:$0xf]
      %v182 = vld [vmem:[%s166 + $0x20] sm:$0xf]
      %v183 = vld [vmem:[%s166 + $0x24] sm:$0xf]
      %v184 = vld [vmem:[%s166 + $0x28] sm:$0xf]
      %v185 = vld [vmem:[%s166 + $0x2c] sm:$0xf]
      %v186 = vld [vmem:[%s166 + $0x30] sm:$0xf]
      %v187 = vld [vmem:[%s166 + $0x34] sm:$0xf]
      %v188 = vld [vmem:[%s166 + $0x38] sm:$0xf]
      %v189 = vld [vmem:[%s166 + $0x3c] sm:$0xf]
      %v190 = vld [vmem:[%s166 + $0x40] sm:$0xf]
      %v191 = vld [vmem:[%s166 + $0x44] sm:$0xf]
      %v192 = vld [vmem:[%s166 + $0x48] sm:$0xf]
      %v193 = vld [vmem:[%s166 + $0x4c] sm:$0xf]
      %v194 = vld [vmem:[%s166 + $0x50] sm:$0xf]
      %v195 = vld [vmem:[%s166 + $0x54] sm:$0xf]
      %v196 = vld [vmem:[%s166 + $0x58] sm:$0xf]
      %v197 = vld [vmem:[%s166 + $0x5c] sm:$0xf]
      %v198 = vld [vmem:[%s166 + $0x60] sm:$0xf]
      %v199 = vld [vmem:[%s166 + $0x64] sm:$0xf]
      %v200 = vld [vmem:[%s166 + $0x68] sm:$0xf]
      %v201 = vld [vmem:[%s166 + $0x6c] sm:$0xf]
      %v202 = vld [vmem:[%s166 + $0x70] sm:$0xf]
      %v203 = vld [vmem:[%s166 + $0x74] sm:$0xf]
      %v204 = vld [vmem:[%s166 + $0x78] sm:$0xf]
      %v205 = vld [vmem:[%s166 + $0x7c] sm:$0xf]
      %v206 = vunpack.c.l.bf16 %v174
      %v207 = vunpack.c.l.bf16 %v175
      %v208 = vunpack.c.l.bf16 %v176
      %v209 = vunpack.c.l.bf16 %v177
      %v210 = vunpack.c.l.bf16 %v178
      %v211 = vunpack.c.l.bf16 %v179
      %v212 = vunpack.c.l.bf16 %v180
      %v213 = vunpack.c.l.bf16 %v181
      %v214 = vunpack.c.l.bf16 %v182
      %v215 = vunpack.c.l.bf16 %v183
      %v216 = vunpack.c.l.bf16 %v184
      %v217 = vunpack.c.l.bf16 %v185
      %v218 = vunpack.c.l.bf16 %v186
      %v219 = vunpack.c.l.bf16 %v187
      %v220 = vunpack.c.l.bf16 %v188
      %v221 = vunpack.c.l.bf16 %v189
      %v222 = vunpack.c.l.bf16 %v190
      %v223 = vunpack.c.l.bf16 %v191
      %v224 = vunpack.c.l.bf16 %v192
      %v225 = vunpack.c.l.bf16 %v193
      %v226 = vunpack.c.l.bf16 %v194
      %v227 = vunpack.c.l.bf16 %v195
      %v228 = vunpack.c.l.bf16 %v196
      %v229 = vunpack.c.l.bf16 %v197
      %v230 = vunpack.c.l.bf16 %v198
      %v231 = vunpack.c.l.bf16 %v199
      %v232 = vunpack.c.l.bf16 %v200
      %v233 = vunpack.c.l.bf16 %v201
      %v234 = vunpack.c.l.bf16 %v202
      %v235 = vunpack.c.l.bf16 %v203
      %v236 = vunpack.c.l.bf16 %v204
      %v237 = vunpack.c.l.bf16 %v205
      %v238 = vld [vmem:[%s1] sm:$0x1]
      %v240 = vlaneseq
      %v241 = vshrl.u32 %v240, 7
      %v242 = vsub.s32 0, %v241
      %v243 = vrot.slane %v238, %v242
      %v245 = vmul.f32 %v206, %v243
      %v246 = vmul.f32 %v207, %v243
      %v247 = vmul.f32 %v208, %v243
      %v248 = vmul.f32 %v209, %v243
      %v249 = vmul.f32 %v210, %v243
      %v250 = vmul.f32 %v211, %v243
      %v251 = vmul.f32 %v212, %v243
      %v252 = vmul.f32 %v213, %v243
      %v253 = vmul.f32 %v214, %v243
      %v254 = vmul.f32 %v215, %v243
      %v255 = vmul.f32 %v216, %v243
      %v256 = vmul.f32 %v217, %v243
      %v257 = vmul.f32 %v218, %v243
      %v258 = vmul.f32 %v219, %v243
      %v259 = vmul.f32 %v220, %v243
      %v260 = vmul.f32 %v221, %v243
      %v261 = vmul.f32 %v222, %v243
      %v262 = vmul.f32 %v223, %v243
      %v263 = vmul.f32 %v224, %v243
      %v264 = vmul.f32 %v225, %v243
      %v265 = vmul.f32 %v226, %v243
      %v266 = vmul.f32 %v227, %v243
      %v267 = vmul.f32 %v228, %v243
      %v268 = vmul.f32 %v229, %v243
      %v269 = vmul.f32 %v230, %v243
      %v270 = vmul.f32 %v231, %v243
      %v271 = vmul.f32 %v232, %v243
      %v272 = vmul.f32 %v233, %v243
      %v273 = vmul.f32 %v234, %v243
      %v274 = vmul.f32 %v235, %v243
      %v275 = vmul.f32 %v236, %v243
      %v276 = vmul.f32 %v237, %v243
      %v277 = vld [vmem:[%s2] sm:$0x1]
      %v279 = vlaneseq
      %v280 = vshrl.u32 %v279, 7
      %v281 = vsub.s32 0, %v280
      %v282 = vrot.slane %v277, %v281
      %v284 = vadd.f32 %v245, %v282
      %v285 = vadd.f32 %v246, %v282
      %v286 = vadd.f32 %v247, %v282
      %v287 = vadd.f32 %v248, %v282
      %v288 = vadd.f32 %v249, %v282
      %v289 = vadd.f32 %v250, %v282
      %v290 = vadd.f32 %v251, %v282
      %v291 = vadd.f32 %v252, %v282
      %v292 = vadd.f32 %v253, %v282
      %v293 = vadd.f32 %v254, %v282
      %v294 = vadd.f32 %v255, %v282
      %v295 = vadd.f32 %v256, %v282
      %v296 = vadd.f32 %v257, %v282
      %v297 = vadd.f32 %v258, %v282
      %v298 = vadd.f32 %v259, %v282
      %v299 = vadd.f32 %v260, %v282
      %v300 = vadd.f32 %v261, %v282
      %v301 = vadd.f32 %v262, %v282
      %v302 = vadd.f32 %v263, %v282
      %v303 = vadd.f32 %v264, %v282
      %v304 = vadd.f32 %v265, %v282
      %v305 = vadd.f32 %v266, %v282
      %v306 = vadd.f32 %v267, %v282
      %v307 = vadd.f32 %v268, %v282
      %v308 = vadd.f32 %v269, %v282
      %v309 = vadd.f32 %v270, %v282
      %v310 = vadd.f32 %v271, %v282
      %v311 = vadd.f32 %v272, %v282
      %v312 = vadd.f32 %v273, %v282
      %v313 = vadd.f32 %v274, %v282
      %v314 = vadd.f32 %v275, %v282
      %v315 = vadd.f32 %v276, %v282
      %v316 = vmul.f32 %v284, 0.01
      %v317 = vmul.f32 %v285, 0.01
      %v318 = vmul.f32 %v286, 0.01
      %v319 = vmul.f32 %v287, 0.01
      %v320 = vmul.f32 %v288, 0.01
      %v321 = vmul.f32 %v289, 0.01
      %v322 = vmul.f32 %v290, 0.01
      %v323 = vmul.f32 %v291, 0.01
      %v324 = vmul.f32 %v292, 0.01
      %v325 = vmul.f32 %v293, 0.01
      %v326 = vmul.f32 %v294, 0.01
      %v327 = vmul.f32 %v295, 0.01
      %v328 = vmul.f32 %v296, 0.01
      %v329 = vmul.f32 %v297, 0.01
      %v330 = vmul.f32 %v298, 0.01
      %v331 = vmul.f32 %v299, 0.01
      %v332 = vmul.f32 %v300, 0.01
      %v333 = vmul.f32 %v301, 0.01
      %v334 = vmul.f32 %v302, 0.01
      %v335 = vmul.f32 %v303, 0.01
      %v336 = vmul.f32 %v304, 0.01
      %v337 = vmul.f32 %v305, 0.01
      %v338 = vmul.f32 %v306, 0.01
      %v339 = vmul.f32 %v307, 0.01
      %v340 = vmul.f32 %v308, 0.01
      %v341 = vmul.f32 %v309, 0.01
      %v342 = vmul.f32 %v310, 0.01
      %v343 = vmul.f32 %v311, 0.01
      %v344 = vmul.f32 %v312, 0.01
      %v345 = vmul.f32 %v313, 0.01
      %v346 = vmul.f32 %v314, 0.01
      %v347 = vmul.f32 %v315, 0.01
      %v348 = vmax.f32 %v284, %v316
      %v349 = vmax.f32 %v285, %v317
      %v350 = vmax.f32 %v286, %v318
      %v351 = vmax.f32 %v287, %v319
      %v352 = vmax.f32 %v288, %v320
      %v353 = vmax.f32 %v289, %v321
      %v354 = vmax.f32 %v290, %v322
      %v355 = vmax.f32 %v291, %v323
      %v356 = vmax.f32 %v292, %v324
      %v357 = vmax.f32 %v293, %v325
      %v358 = vmax.f32 %v294, %v326
      %v359 = vmax.f32 %v295, %v327
      %v360 = vmax.f32 %v296, %v328
      %v361 = vmax.f32 %v297, %v329
      %v362 = vmax.f32 %v298, %v330
      %v363 = vmax.f32 %v299, %v331
      %v364 = vmax.f32 %v300, %v332
      %v365 = vmax.f32 %v301, %v333
      %v366 = vmax.f32 %v302, %v334
      %v367 = vmax.f32 %v303, %v335
      %v368 = vmax.f32 %v304, %v336
      %v369 = vmax.f32 %v305, %v337
      %v370 = vmax.f32 %v306, %v338
      %v371 = vmax.f32 %v307, %v339
      %v372 = vmax.f32 %v308, %v340
      %v373 = vmax.f32 %v309, %v341
      %v374 = vmax.f32 %v310, %v342
      %v375 = vmax.f32 %v311, %v343
      %v376 = vmax.f32 %v312, %v344
      %v377 = vmax.f32 %v313, %v345
      %v378 = vmax.f32 %v314, %v346
      %v379 = vmax.f32 %v315, %v347
      %v380 = vpack.c.bf16 %v349, %v348
      %v381 = vpack.c.bf16 %v351, %v350
      %v382 = vpack.c.bf16 %v353, %v352
      %v383 = vpack.c.bf16 %v355, %v354
      %v384 = vpack.c.bf16 %v357, %v356
      %v385 = vpack.c.bf16 %v359, %v358
      %v386 = vpack.c.bf16 %v361, %v360
      %v387 = vpack.c.bf16 %v363, %v362
      %v388 = vpack.c.bf16 %v365, %v364
      %v389 = vpack.c.bf16 %v367, %v366
      %v390 = vpack.c.bf16 %v369, %v368
      %v391 = vpack.c.bf16 %v371, %v370
      %v392 = vpack.c.bf16 %v373, %v372
      %v393 = vpack.c.bf16 %v375, %v374
      %v394 = vpack.c.bf16 %v377, %v376
      %v395 = vpack.c.bf16 %v379, %v378
      %v412 = vunpack.c.l.b16 %v380
      %v413 = vunpack.c.h.b16 %v380
      %v414 = vunpack.c.l.b16 %v381
      %v415 = vunpack.c.h.b16 %v381
      %v416 = vunpack.c.l.b16 %v382
      %v417 = vunpack.c.h.b16 %v382
      %v418 = vunpack.c.l.b16 %v383
      %v419 = vunpack.c.h.b16 %v383
      %v420 = vunpack.c.l.b16 %v384
      %v421 = vunpack.c.h.b16 %v384
      %v422 = vunpack.c.l.b16 %v385
      %v423 = vunpack.c.h.b16 %v385
      %v424 = vunpack.c.l.b16 %v386
      %v425 = vunpack.c.h.b16 %v386
      %v426 = vunpack.c.l.b16 %v387
      %v427 = vunpack.c.h.b16 %v387
      %v428 = vunpack.c.l.b16 %v388
      %v429 = vunpack.c.h.b16 %v388
      %v430 = vunpack.c.l.b16 %v389
      %v431 = vunpack.c.h.b16 %v389
      %v432 = vunpack.c.l.b16 %v390
      %v433 = vunpack.c.h.b16 %v390
      %v434 = vunpack.c.l.b16 %v391
      %v435 = vunpack.c.h.b16 %v391
      %v436 = vunpack.c.l.b16 %v392
      %v437 = vunpack.c.h.b16 %v392
      %v438 = vunpack.c.l.b16 %v393
      %v439 = vunpack.c.h.b16 %v393
      %v440 = vunpack.c.l.b16 %v394
      %v441 = vunpack.c.h.b16 %v394
      %v442 = vunpack.c.l.b16 %v395
      %v443 = vunpack.c.h.b16 %v395
      %v444 = vpack.c.b16 %v412, %v412
      %v445 = vpack.c.b16 %v413, %v413
      %v446 = vpack.c.b16 %v414, %v414
      %v447 = vpack.c.b16 %v415, %v415
      %v448 = vpack.c.b16 %v416, %v416
      %v449 = vpack.c.b16 %v417, %v417
      %v450 = vpack.c.b16 %v418, %v418
      %v451 = vpack.c.b16 %v419, %v419
      %v452 = vpack.c.b16 %v420, %v420
      %v453 = vpack.c.b16 %v421, %v421
      %v454 = vpack.c.b16 %v422, %v422
      %v455 = vpack.c.b16 %v423, %v423
      %v456 = vpack.c.b16 %v424, %v424
      %v457 = vpack.c.b16 %v425, %v425
      %v458 = vpack.c.b16 %v426, %v426
      %v459 = vpack.c.b16 %v427, %v427
      %v460 = vpack.c.b16 %v428, %v428
      %v461 = vpack.c.b16 %v429, %v429
      %v462 = vpack.c.b16 %v430, %v430
      %v463 = vpack.c.b16 %v431, %v431
      %v464 = vpack.c.b16 %v432, %v432
      %v465 = vpack.c.b16 %v433, %v433
      %v466 = vpack.c.b16 %v434, %v434
      %v467 = vpack.c.b16 %v435, %v435
      %v468 = vpack.c.b16 %v436, %v436
      %v469 = vpack.c.b16 %v437, %v437
      %v470 = vpack.c.b16 %v438, %v438
      %v471 = vpack.c.b16 %v439, %v439
      %v472 = vpack.c.b16 %v440, %v440
      %v473 = vpack.c.b16 %v441, %v441
      %v474 = vpack.c.b16 %v442, %v442
      %v475 = vpack.c.b16 %v443, %v443
      %508 = vst [vmem:[%s172] sm:$0xf] %v444
      %509 = vst [vmem:[%s172 + $0x4] sm:$0xf] %v445
      %510 = vst [vmem:[%s172 + $0x8] sm:$0xf] %v446
      %511 = vst [vmem:[%s172 + $0xc] sm:$0xf] %v447
      %512 = vst [vmem:[%s172 + $0x10] sm:$0xf] %v448
      %513 = vst [vmem:[%s172 + $0x14] sm:$0xf] %v449
      %514 = vst [vmem:[%s172 + $0x18] sm:$0xf] %v450
      %515 = vst [vmem:[%s172 + $0x1c] sm:$0xf] %v451
      %516 = vst [vmem:[%s172 + $0x20] sm:$0xf] %v452
      %517 = vst [vmem:[%s172 + $0x24] sm:$0xf] %v453
      %518 = vst [vmem:[%s172 + $0x28] sm:$0xf] %v454
      %519 = vst [vmem:[%s172 + $0x2c] sm:$0xf] %v455
      %520 = vst [vmem:[%s172 + $0x30] sm:$0xf] %v456
      %521 = vst [vmem:[%s172 + $0x34] sm:$0xf] %v457
      %522 = vst [vmem:[%s172 + $0x38] sm:$0xf] %v458
      %523 = vst [vmem:[%s172 + $0x3c] sm:$0xf] %v459
      %524 = vst [vmem:[%s172 + $0x40] sm:$0xf] %v460
      %525 = vst [vmem:[%s172 + $0x44] sm:$0xf] %v461
      %526 = vst [vmem:[%s172 + $0x48] sm:$0xf] %v462
      %527 = vst [vmem:[%s172 + $0x4c] sm:$0xf] %v463
      %528 = vst [vmem:[%s172 + $0x50] sm:$0xf] %v464
      %529 = vst [vmem:[%s172 + $0x54] sm:$0xf] %v465
      %530 = vst [vmem:[%s172 + $0x58] sm:$0xf] %v466
      %531 = vst [vmem:[%s172 + $0x5c] sm:$0xf] %v467
      %532 = vst [vmem:[%s172 + $0x60] sm:$0xf] %v468
      %533 = vst [vmem:[%s172 + $0x64] sm:$0xf] %v469
      %534 = vst [vmem:[%s172 + $0x68] sm:$0xf] %v470
      %535 = vst [vmem:[%s172 + $0x6c] sm:$0xf] %v471
      %536 = vst [vmem:[%s172 + $0x70] sm:$0xf] %v472
      %537 = vst [vmem:[%s172 + $0x74] sm:$0xf] %v473
      %538 = vst [vmem:[%s172 + $0x78] sm:$0xf] %v474
      %539 = vst [vmem:[%s172 + $0x7c] sm:$0xf] %v475
      %s540 = smul.u32 32, %s14
      %p541 = scmp.lt.s32.totalorder %s540, 63
      %s542 = scalar_select %p541, %s540, 63
      %s543 = smul.addr %s542, 4
      %s544 = scalar_lea.vmem %s3, %s543
      // Predicated region
      $region33: #{discrim_block_forward.5} parent=31 // pred_check
        %p545 = pneg %p100
      $region34: #{discrim_block_forward.5} parent=31 // pred_check_branch
        %547 = sbr.rel (%p545) target = $region36
      $region35: #{discrim_block_forward.5} parent=31 // pred_region
        %s548 = smul.u32 32, %s14
      $region36: #{discrim_block_forward.5} parent=31 // pred_fallthru
        _
    $region32: #{discrim_block_forward.5} parent=5 // pred_fallthru
      _
    %p549 = scmp.le.s32.totalorder 2, %s9
    // Predicated region
    $region37: #{discrim_block_forward.5} parent=5 // pred_check
      %p550 = pneg %p549
    $region38: #{discrim_block_forward.5} parent=5 // pred_check_branch
      %552 = sbr.rel (%p550) target = $region40
    $region39: #{discrim_block_forward.5} parent=5 // pred_region
      %s553 = ssub.s32 %s9, 2
      // Predicated region
      $region41: #{discrim_block_forward.5} parent=39 // pred_check
        %p554 = pneg %p106
      $region42: #{discrim_block_forward.5} parent=39 // pred_check_branch
        %556 = sbr.rel (%p554) target = $region44
      $region43: #{discrim_block_forward.5} parent=39 // pred_region
        %s557 = smul.u32 32, %s15
        %p558 = scmp.lt.s32.totalorder %s557, 63
        %s559 = scalar_select %p558, %s557, 63
        %s560 = smul.addr %s559, 4
        %s561 = scalar_lea.vmem %s3, %s560
      $region44: #{discrim_block_forward.5} parent=39 // pred_fallthru
        _
    $region40: #{discrim_block_forward.5} parent=5 // pred_fallthru
      _
  $region6: #{discrim_block_forward.5} parent=0 // loop_footer
    %s13 = sadd.s32 1, %s9
  $region7: #{discrim_block_forward.5} parent=0 // loop_footer_branch
    %8 = sbr.rel target = $region3
  $region8: #{discrim_block_forward.5} parent=0 // loop_exit
    _

// kernel: discrim_block_forward.4
$region0: #{discrim_block_forward.4}
  #allocation0 [shape = 'u32[]', space=smem, size = 0x4, offset = 0x4, fixed_abs, tag = 'smem constant byte address 0x4 - core index']
  #allocation1 [shape = 'u32[144,128]{1,0:T(1,128)}', space=vmem, size = 0x12000, scoped, tag = 'internal scratch']
  #allocation2 [shape = 'f32[256,128]{1,0:T(8,128)}', space=vmem, size = 0x20000, scoped, tag = 'scratch operand']
  %s0 = inlined_call_operand.vmem [shape: bf16[512,128], index: 0, kind: input, shape index: {}]
  %s1 = inlined_call_operand.vmem [shape: bf16[128,128], index: 1, kind: input, shape index: {}]
  %s2 = inlined_call_operand.vmem [shape: bf16[512,128], index: 2, kind: output, shape index: {0}]
  %s3 = inlined_call_operand.vmem [shape: f32[2,1,128], index: 3, kind: output, shape index: {1}]
  %s4 = inlined_call_operand.vmem [shape: f32[2,1,128], index: 4, kind: output, shape index: {2}]
  %5 = xla_tuple %s2, %s3, %s4
  %s6 = sld [smem:[#allocation0]]
  $region65: #{discrim_block_forward.4} parent=0
    _
  %s8 = ssub.s32 1, %s6
  %s9 = scalar_select 0, %s8, %s6
  loop: start=0, step=1, limit=4
  $region2: #{discrim_block_forward.4} parent=0 // loop_pre_header
    _
  $region3: #{discrim_block_forward.4} parent=0 // loop_header
    %s11 = sphi 0, %s15
    %p12 = scmp.ge.s32.totalorder %s11, 4
    %s18 = sphi 0, %s37
    %s19 = sphi 0, %s33
    %s20 = sphi 0, %s29
    %s21 = sphi 0, %s18
    %s22 = sphi 0, %s19
    %s23 = sphi 0, %s20
    %s24 = sphi 0, %s21
    %s25 = sphi 0, %s22
    %s26 = sphi 0, %s23
    %s42 = sphi 0, %s44
    %s45 = sphi 0, %s42
    %s46 = sphi 0, %s45
    %s62 = sphi 0, %s46
    %s70 = sphi 0, %s72
    %s73 = sphi 0, %s70
    %s74 = sphi 0, %s73
    %s90 = sphi 0, %s74
    %s98 = sphi 0, %s100
    %s101 = sphi 0, %s98
    %s102 = sphi 0, %s101
    %s118 = sphi 0, %s102
    %s126 = sphi 0, %s128
    %s129 = sphi 0, %s126
    %s130 = sphi 0, %s129
    %s146 = sphi 0, %s130
    %s154 = sphi 0, %s156
    %s157 = sphi 0, %s154
    %s158 = sphi 0, %s157
    %s174 = sphi 0, %s158
  $region4: #{discrim_block_forward.4} parent=0 // loop_header_branch
    %14 = sbr.rel (%p12) target = $region8
  $region5: #{discrim_block_forward.4} parent=0 // loop_body
    %s16 = ssub.s32 %s11, 1
    %s17 = ssub.s32 %s11, 2
    %s27 = sadd.s32 1, %s20
    %p28 = scmp.ge.s32.totalorder %s27, 1
    %s29 = scalar_select %p28, 0, %s27
    %s30 = sadd.s32 1, %s19
    %s31 = scalar_select %p28, %s30, %s19
    %p32 = scmp.ge.s32.totalorder %s31, 1
    %s33 = scalar_select %p32, 0, %s31
    %s34 = sadd.s32 1, %s18
    %s35 = scalar_select %p32, %s34, %s18
    %p36 = scmp.ge.s32.totalorder %s35, 2
    %s37 = scalar_select %p36, 0, %s35
    %s38 = ssub.s32 %s18, %s37
    %s39 = ssub.s32 %s20, %s29
    %s40 = sor.u32 %s38, %s39
    %p41 = scmp.eq.s32.totalorder %s40, 0
    %s43 = sadd.s32 %s42, 1
    %s44 = scalar_select %p41, %s42, %s43
    %p47 = pneg %p41
    %p48 = scmp.eq.s32.totalorder %s11, 1
    %p49 = por %p47, %p48
    %p50 = scmp.ne.s32.totalorder %s42, %s45
    %p51 = scmp.eq.s32.totalorder %s11, 0
    %p52 = por %p50, %p51
    %p53 = scmp.ne.s32.totalorder %s42, %s45
    %p54 = scmp.eq.s32.totalorder %s16, 1
    %p55 = por %p53, %p54
    %p56 = scmp.ne.s32.totalorder %s45, %s46
    %p57 = scmp.eq.s32.totalorder %s16, 0
    %p58 = por %p56, %p57
    %p59 = scmp.ne.s32.totalorder %s45, %s46
    %p60 = scmp.eq.s32.totalorder %s17, 1
    %p61 = por %p59, %p60
    %p63 = scmp.ne.s32.totalorder %s46, %s62
    %p64 = scmp.eq.s32.totalorder %s17, 0
    %p65 = por %p63, %p64
    %s66 = ssub.s32 %s20, %s29
    %s67 = ssub.s32 %s19, %s33
    %s68 = sor.u32 %s66, %s67
    %p69 = scmp.eq.s32.totalorder %s68, 0
    %s71 = sadd.s32 %s70, 1
    %s72 = scalar_select %p69, %s70, %s71
    %p75 = pneg %p69
    %p76 = scmp.eq.s32.totalorder %s11, 1
    %p77 = por %p75, %p76
    %p78 = scmp.ne.s32.totalorder %s70, %s73
    %p79 = scmp.eq.s32.totalorder %s11, 0
    %p80 = por %p78, %p79
    %p81 = scmp.ne.s32.totalorder %s70, %s73
    %p82 = scmp.eq.s32.totalorder %s16, 1
    %p83 = por %p81, %p82
    %p84 = scmp.ne.s32.totalorder %s73, %s74
    %p85 = scmp.eq.s32.totalorder %s16, 0
    %p86 = por %p84, %p85
    %p87 = scmp.ne.s32.totalorder %s73, %s74
    %p88 = scmp.eq.s32.totalorder %s17, 1
    %p89 = por %p87, %p88
    %p91 = scmp.ne.s32.totalorder %s74, %s90
    %p92 = scmp.eq.s32.totalorder %s17, 0
    %p93 = por %p91, %p92
    %s94 = ssub.s32 %s18, %s37
    %s95 = ssub.s32 %s19, %s33
    %s96 = sor.u32 %s94, %s95
    %p97 = scmp.eq.s32.totalorder %s96, 0
    %s99 = sadd.s32 %s98, 1
    %s100 = scalar_select %p97, %s98, %s99
    %p103 = pneg %p97
    %p104 = scmp.eq.s32.totalorder %s11, 1
    %p105 = por %p103, %p104
    %p106 = scmp.ne.s32.totalorder %s98, %s101
    %p107 = scmp.eq.s32.totalorder %s11, 0
    %p108 = por %p106, %p107
    %p109 = scmp.ne.s32.totalorder %s98, %s101
    %p110 = scmp.eq.s32.totalorder %s16, 1
    %p111 = por %p109, %p110
    %p112 = scmp.ne.s32.totalorder %s101, %s102
    %p113 = scmp.eq.s32.totalorder %s16, 0
    %p114 = por %p112, %p113
    %p115 = scmp.ne.s32.totalorder %s101, %s102
    %p116 = scmp.eq.s32.totalorder %s17, 1
    %p117 = por %p115, %p116
    %p119 = scmp.ne.s32.totalorder %s102, %s118
    %p120 = scmp.eq.s32.totalorder %s17, 0
    %p121 = por %p119, %p120
    %s122 = ssub.s32 %s18, %s37
    %s123 = ssub.s32 %s19, %s33
    %s124 = sor.u32 %s122, %s123
    %p125 = scmp.eq.s32.totalorder %s124, 0
    %s127 = sadd.s32 %s126, 1
    %s128 = scalar_select %p125, %s126, %s127
    %p131 = pneg %p125
    %p132 = scmp.eq.s32.totalorder %s11, 1
    %p133 = por %p131, %p132
    %p134 = scmp.ne.s32.totalorder %s126, %s129
    %p135 = scmp.eq.s32.totalorder %s11, 0
    %p136 = por %p134, %p135
    %p137 = scmp.ne.s32.totalorder %s126, %s129
    %p138 = scmp.eq.s32.totalorder %s16, 1
    %p139 = por %p137, %p138
    %p140 = scmp.ne.s32.totalorder %s129, %s130
    %p141 = scmp.eq.s32.totalorder %s16, 0
    %p142 = por %p140, %p141
    %p143 = scmp.ne.s32.totalorder %s129, %s130
    %p144 = scmp.eq.s32.totalorder %s17, 1
    %p145 = por %p143, %p144
    %p147 = scmp.ne.s32.totalorder %s130, %s146
    %p148 = scmp.eq.s32.totalorder %s17, 0
    %p149 = por %p147, %p148
    %s150 = ssub.s32 %s18, %s37
    %s151 = ssub.s32 %s19, %s33
    %s152 = sor.u32 %s150, %s151
    %p153 = scmp.eq.s32.totalorder %s152, 0
    %s155 = sadd.s32 %s154, 1
    %s156 = scalar_select %p153, %s154, %s155
    %p159 = pneg %p153
    %p160 = scmp.eq.s32.totalorder %s11, 1
    %p161 = por %p159, %p160
    %p162 = scmp.ne.s32.totalorder %s154, %s157
    %p163 = scmp.eq.s32.totalorder %s11, 0
    %p164 = por %p162, %p163
    %p165 = scmp.ne.s32.totalorder %s154, %s157
    %p166 = scmp.eq.s32.totalorder %s16, 1
    %p167 = por %p165, %p166
    %p168 = scmp.ne.s32.totalorder %s157, %s158
    %p169 = scmp.eq.s32.totalorder %s16, 0
    %p170 = por %p168, %p169
    %p171 = scmp.ne.s32.totalorder %s157, %s158
    %p172 = scmp.eq.s32.totalorder %s17, 1
    %p173 = por %p171, %p172
    %p175 = scmp.ne.s32.totalorder %s158, %s174
    %p176 = scmp.eq.s32.totalorder %s17, 0
    %p177 = por %p175, %p176
    %p178 = scmp.le.s32.totalorder 1, %s11
    %p179 = scmp.lt.s32.totalorder %s11, 3
    %p180 = pnand %p178, %p179
    %p181 = pneg %p180
    // Predicated region
    $region9: #{discrim_block_forward.4} parent=5 // pred_check
      _
    $region10: #{discrim_block_forward.4} parent=5 // pred_check_branch
      %183 = sbr.rel (%p180) target = $region12
    $region11: #{discrim_block_forward.4} parent=5 // pred_region
      %s184 = ssub.s32 %s11, 1
      // Predicated region
      $region13: #{discrim_block_forward.4} parent=11 // pred_check
        %p185 = pneg %p86
      $region14: #{discrim_block_forward.4} parent=11 // pred_check_branch
        %187 = sbr.rel (%p185) target = $region16
      $region15: #{discrim_block_forward.4} parent=11 // pred_region
        %s188 = smul.u32 16, %s23
        %p189 = scmp.lt.s32.totalorder %s188, 15
        %s190 = scalar_select %p189, %s188, 15
        %p191 = scmp.lt.s32.totalorder %s22, 0
        %s192 = scalar_select %p191, %s22, 0
        %s193 = sadd.s32 %s192, %s190
        %s194 = smul.addr %s193, 4
        %s195 = scalar_lea.vmem %s1, %s194
        %s196 = smul.u32 16, %s23
      $region16: #{discrim_block_forward.4} parent=11 // pred_fallthru
        _
    $region12: #{discrim_block_forward.4} parent=5 // pred_fallthru
      _
    %p197 = scmp.lt.s32.totalorder %s11, 2
    // Predicated region
    $region17: #{discrim_block_forward.4} parent=5 // pred_check
      %p198 = pneg %p197
    $region18: #{discrim_block_forward.4} parent=5 // pred_check_branch
      %200 = sbr.rel (%p198) target = $region20
    $region19: #{discrim_block_forward.4} parent=5 // pred_region
      // Predicated region
      $region21: #{discrim_block_forward.4} parent=19 // pred_check
        %p201 = pneg %p52
      $region22: #{discrim_block_forward.4} parent=19 // pred_check_branch
        %203 = sbr.rel (%p201) target = $region24
      $region23: #{discrim_block_forward.4} parent=19 // pred_region
        %s204 = smul.u32 32, %s18
        %p205 = scmp.lt.s32.totalorder %s204, 63
        %s206 = scalar_select %p205, %s204, 63
        %p207 = scmp.lt.s32.totalorder %s20, 0
        %s208 = scalar_select %p207, %s20, 0
        %s209 = sadd.s32 %s208, %s206
        %s210 = smul.addr %s209, 4
        %s211 = scalar_lea.vmem %s0, %s210
        %s212 = smul.u32 32, %s18
      $region24: #{discrim_block_forward.4} parent=19 // pred_fallthru
        _
    $region20: #{discrim_block_forward.4} parent=5 // pred_fallthru
      _
    %p213 = scmp.le.s32.totalorder 1, %s11
    %p214 = scmp.lt.s32.totalorder %s11, 3
    %p215 = pnand %p213, %p214
    %p216 = pneg %p215
    // Predicated region
    $region25: #{discrim_block_forward.4} parent=5 // pred_check
      _
    $region26: #{discrim_block_forward.4} parent=5 // pred_check_branch
      %218 = sbr.rel (%p215) target = $region28
    $region27: #{discrim_block_forward.4} parent=5 // pred_region
      %s219 = ssub.s32 %s11, 1
      %s220 = smul.u32 32, %s21
      %p221 = scmp.lt.s32.totalorder %s220, 63
      %s222 = scalar_select %p221, %s220, 63
      %p223 = scmp.lt.s32.totalorder %s23, 0
      %s224 = scalar_select %p223, %s23, 0
      %s225 = sadd.s32 %s224, %s222
      %s226 = smul.addr %s225, 4
      %s227 = scalar_lea.vmem %s0, %s226
      %p228 = pneg %p58
      %p229 = pneg %p55
      %s230 = smul.u32 16, %s23
      %p231 = scmp.lt.s32.totalorder %s230, 15
      %s232 = scalar_select %p231, %s230, 15
      %p233 = scmp.lt.s32.totalorder %s22, 0
      %s234 = scalar_select %p233, %s22, 0
      %s235 = sadd.s32 %s234, %s232
      %s236 = smul.addr %s235, 4
      %s237 = scalar_lea.vmem %s1, %s236
      %p238 = pneg %p86
      %p239 = pneg %p83
      %p240 = pneg %p114
      %p241 = pneg %p111
      %s242 = smul.u32 32, %s21
      %p243 = scmp.lt.s32.totalorder %s242, 63
      %s244 = scalar_select %p243, %s242, 63
      %p245 = scmp.lt.s32.totalorder %s22, 0
      %s246 = scalar_select %p245, %s22, 0
      %s247 = sadd.s32 %s246, %s244
      %s248 = smul.addr %s247, 4
      %s249 = scalar_lea.vmem %s2, %s248
      %p250 = pneg %p142
      %p251 = pneg %p139
      %p252 = scmp.lt.s32.totalorder %s21, 1
      %s253 = scalar_select %p252, %s21, 1
      %p254 = scmp.lt.s32.totalorder %s22, 0
      %s255 = scalar_select %p254, %s22, 0
      %s256 = sadd.s32 %s255, %s253
      %s257 = scalar_lea.vmem %s3, %s256
      %p258 = pneg %p170
      %p259 = pneg %p167
      %p260 = scmp.lt.s32.totalorder %s21, 1
      %s261 = scalar_select %p260, %s21, 1
      %p262 = scmp.lt.s32.totalorder %s22, 0
      %s263 = scalar_select %p262, %s22, 0
      %s264 = sadd.s32 %s263, %s261
      %s265 = scalar_lea.vmem %s4, %s264
      %s266 = smul.u32 32, %s21
      %p267 = scmp.lt.s32.totalorder %s266, 63
      %s268 = scalar_select %p267, %s266, 63
      %p269 = scmp.lt.s32.totalorder %s23, 0
      %s270 = scalar_select %p269, %s23, 0
      %s271 = sadd.s32 %s270, %s268
      %s272 = smul.addr %s271, 4
      %s273 = scalar_lea.vmem %s0, %s272
      %s274 = smul.u32 32, %s21
      %s275 = smul.u32 16, %s23
      %p276 = scmp.lt.s32.totalorder %s275, 15
      %s277 = scalar_select %p276, %s275, 15
      %p278 = scmp.lt.s32.totalorder %s22, 0
      %s279 = scalar_select %p278, %s22, 0
      %s280 = sadd.s32 %s279, %s277
      %s281 = smul.addr %s280, 4
      %s282 = scalar_lea.vmem %s1, %s281
      %s283 = smul.u32 16, %s23
      %s284 = smul.u32 32, %s21
      %p285 = scmp.lt.s32.totalorder %s284, 63
      %s286 = scalar_select %p285, %s284, 63
      %p287 = scmp.lt.s32.totalorder %s22, 0
      %s288 = scalar_select %p287, %s22, 0
      %s289 = sadd.s32 %s288, %s286
      %s290 = smul.addr %s289, 4
      %s291 = scalar_lea.vmem %s2, %s290
      %s292 = smul.u32 32, %s21
      %p293 = scmp.lt.s32.totalorder %s21, 1
      %s294 = scalar_select %p293, %s21, 1
      %p295 = scmp.lt.s32.totalorder %s22, 0
      %s296 = scalar_select %p295, %s22, 0
      %s297 = sadd.s32 %s296, %s294
      %s298 = scalar_lea.vmem %s3, %s297
      %p299 = scmp.lt.s32.totalorder %s21, 1
      %s300 = scalar_select %p299, %s21, 1
      %p301 = scmp.lt.s32.totalorder %s22, 0
      %s302 = scalar_select %p301, %s22, 0
      %s303 = sadd.s32 %s302, %s300
      %s304 = scalar_lea.vmem %s4, %s303
      %p306 = scmp.eq.s32.totalorder %s23, 0
      // Predicated region
      $region29: #{discrim_block_forward.4} parent=27 // pred_check
        %p307 = pneg %p306
      $region30: #{discrim_block_forward.4} parent=27 // pred_check_branch
        %309 = sbr.rel (%p307) target = $region32
      $region31: #{discrim_block_forward.4} parent=27 // pred_region
        %310 = vst [vmem:[#allocation2] sm:$0xff] 0.0
        %311 = vst [vmem:[#allocation2 + $0x8] sm:$0xff] 0.0
        %312 = vst [vmem:[#allocation2 + $0x10] sm:$0xff] 0.0
        %313 = vst [vmem:[#allocation2 + $0x18] sm:$0xff] 0.0
        %314 = vst [vmem:[#allocation2 + $0x20] sm:$0xff] 0.0
        %315 = vst [vmem:[#allocation2 + $0x28] sm:$0xff] 0.0
        %316 = vst [vmem:[#allocation2 + $0x30] sm:$0xff] 0.0
        %317 = vst [vmem:[#allocation2 + $0x38] sm:$0xff] 0.0
        %318 = vst [vmem:[#allocation2 + $0x40] sm:$0xff] 0.0
        %319 = vst [vmem:[#allocation2 + $0x48] sm:$0xff] 0.0
        %320 = vst [vmem:[#allocation2 + $0x50] sm:$0xff] 0.0
        %321 = vst [vmem:[#allocation2 + $0x58] sm:$0xff] 0.0
        %322 = vst [vmem:[#allocation2 + $0x60] sm:$0xff] 0.0
        %323 = vst [vmem:[#allocation2 + $0x68] sm:$0xff] 0.0
        %324 = vst [vmem:[#allocation2 + $0x70] sm:$0xff] 0.0
        %325 = vst [vmem:[#allocation2 + $0x78] sm:$0xff] 0.0
        %326 = vst [vmem:[#allocation2 + $0x80] sm:$0xff] 0.0
        %327 = vst [vmem:[#allocation2 + $0x88] sm:$0xff] 0.0
        %328 = vst [vmem:[#allocation2 + $0x90] sm:$0xff] 0.0
        %329 = vst [vmem:[#allocation2 + $0x98] sm:$0xff] 0.0
        %330 = vst [vmem:[#allocation2 + $0xa0] sm:$0xff] 0.0
        %331 = vst [vmem:[#allocation2 + $0xa8] sm:$0xff] 0.0
        %332 = vst [vmem:[#allocation2 + $0xb0] sm:$0xff] 0.0
        %333 = vst [vmem:[#allocation2 + $0xb8] sm:$0xff] 0.0
        %334 = vst [vmem:[#allocation2 + $0xc0] sm:$0xff] 0.0
        %335 = vst [vmem:[#allocation2 + $0xc8] sm:$0xff] 0.0
        %336 = vst [vmem:[#allocation2 + $0xd0] sm:$0xff] 0.0
        %337 = vst [vmem:[#allocation2 + $0xd8] sm:$0xff] 0.0
        %338 = vst [vmem:[#allocation2 + $0xe0] sm:$0xff] 0.0
        %339 = vst [vmem:[#allocation2 + $0xe8] sm:$0xff] 0.0
        %340 = vst [vmem:[#allocation2 + $0xf0] sm:$0xff] 0.0
        %341 = vst [vmem:[#allocation2 + $0xf8] sm:$0xff] 0.0
      $region32: #{discrim_block_forward.4} parent=27 // pred_fallthru
        _
      %v342 = vld [vmem:[#allocation2] sm:$0xff]
      %v343 = vld [vmem:[#allocation2 + $0x8] sm:$0xff]
      %v344 = vld [vmem:[#allocation2 + $0x10] sm:$0xff]
      %v345 = vld [vmem:[#allocation2 + $0x18] sm:$0xff]
      %v346 = vld [vmem:[#allocation2 + $0x20] sm:$0xff]
      %v347 = vld [vmem:[#allocation2 + $0x28] sm:$0xff]
      %v348 = vld [vmem:[#allocation2 + $0x30] sm:$0xff]
      %v349 = vld [vmem:[#allocation2 + $0x38] sm:$0xff]
      %v350 = vld [vmem:[#allocation2 + $0x40] sm:$0xff]
      %v351 = vld [vmem:[#allocation2 + $0x48] sm:$0xff]
      %v352 = vld [vmem:[#allocation2 + $0x50] sm:$0xff]
      %v353 = vld [vmem:[#allocation2 + $0x58] sm:$0xff]
      %v354 = vld [vmem:[#allocation2 + $0x60] sm:$0xff]
      %v355 = vld [vmem:[#allocation2 + $0x68] sm:$0xff]
      %v356 = vld [vmem:[#allocation2 + $0x70] sm:$0xff]
      %v357 = vld [vmem:[#allocation2 + $0x78] sm:$0xff]
      %v358 = vld [vmem:[#allocation2 + $0x80] sm:$0xff]
      %v359 = vld [vmem:[#allocation2 + $0x88] sm:$0xff]
      %v360 = vld [vmem:[#allocation2 + $0x90] sm:$0xff]
      %v361 = vld [vmem:[#allocation2 + $0x98] sm:$0xff]
      %v362 = vld [vmem:[#allocation2 + $0xa0] sm:$0xff]
      %v363 = vld [vmem:[#allocation2 + $0xa8] sm:$0xff]
      %v364 = vld [vmem:[#allocation2 + $0xb0] sm:$0xff]
      %v365 = vld [vmem:[#allocation2 + $0xb8] sm:$0xff]
      %v366 = vld [vmem:[#allocation2 + $0xc0] sm:$0xff]
      %v367 = vld [vmem:[#allocation2 + $0xc8] sm:$0xff]
      %v368 = vld [vmem:[#allocation2 + $0xd0] sm:$0xff]
      %v369 = vld [vmem:[#allocation2 + $0xd8] sm:$0xff]
      %v370 = vld [vmem:[#allocation2 + $0xe0] sm:$0xff]
      %v371 = vld [vmem:[#allocation2 + $0xe8] sm:$0xff]
      %v372 = vld [vmem:[#allocation2 + $0xf0] sm:$0xff]
      %v373 = vld [vmem:[#allocation2 + $0xf8] sm:$0xff]
      %v374 = vld [vmem:[%s273] sm:$0xf]
      %v375 = vld [vmem:[%s273 + $0x4] sm:$0xf]
      %v376 = vld [vmem:[%s273 + $0x8] sm:$0xf]
      %v377 = vld [vmem:[%s273 + $0xc] sm:$0xf]
      %v378 = vld [vmem:[%s273 + $0x10] sm:$0xf]
      %v379 = vld [vmem:[%s273 + $0x14] sm:$0xf]
      %v380 = vld [vmem:[%s273 + $0x18] sm:$0xf]
      %v381 = vld [vmem:[%s273 + $0x1c] sm:$0xf]
      %v382 = vld [vmem:[%s273 + $0x20] sm:$0xf]
      %v383 = vld [vmem:[%s273 + $0x24] sm:$0xf]
      %v384 = vld [vmem:[%s273 + $0x28] sm:$0xf]
      %v385 = vld [vmem:[%s273 + $0x2c] sm:$0xf]
      %v386 = vld [vmem:[%s273 + $0x30] sm:$0xf]
      %v387 = vld [vmem:[%s273 + $0x34] sm:$0xf]
      %v388 = vld [vmem:[%s273 + $0x38] sm:$0xf]
      %v389 = vld [vmem:[%s273 + $0x3c] sm:$0xf]
      %v390 = vld [vmem:[%s273 + $0x40] sm:$0xf]
      %v391 = vld [vmem:[%s273 + $0x44] sm:$0xf]
      %v392 = vld [vmem:[%s273 + $0x48] sm:$0xf]
      %v393 = vld [vmem:[%s273 + $0x4c] sm:$0xf]
      %v394 = vld [vmem:[%s273 + $0x50] sm:$0xf]
      %v395 = vld [vmem:[%s273 + $0x54] sm:$0xf]
      %v396 = vld [vmem:[%s273 + $0x58] sm:$0xf]
      %v397 = vld [vmem:[%s273 + $0x5c] sm:$0xf]
      %v398 = vld [vmem:[%s273 + $0x60] sm:$0xf]
      %v399 = vld [vmem:[%s273 + $0x64] sm:$0xf]
      %v400 = vld [vmem:[%s273 + $0x68] sm:$0xf]
      %v401 = vld [vmem:[%s273 + $0x6c] sm:$0xf]
      %v402 = vld [vmem:[%s273 + $0x70] sm:$0xf]
      %v403 = vld [vmem:[%s273 + $0x74] sm:$0xf]
      %v404 = vld [vmem:[%s273 + $0x78] sm:$0xf]
      %v405 = vld [vmem:[%s273 + $0x7c] sm:$0xf]
      %v406 = vld [vmem:[%s282] sm:$0xf]
      %v407 = vld [vmem:[%s282 + $0x4] sm:$0xf]
      %v408 = vld [vmem:[%s282 + $0x8] sm:$0xf]
      %v409 = vld [vmem:[%s282 + $0xc] sm:$0xf]
      %v410 = vld [vmem:[%s282 + $0x10] sm:$0xf]
      %v411 = vld [vmem:[%s282 + $0x14] sm:$0xf]
      %v412 = vld [vmem:[%s282 + $0x18] sm:$0xf]
      %v413 = vld [vmem:[%s282 + $0x1c] sm:$0xf]
      %v414 = vld [vmem:[%s282 + $0x20] sm:$0xf]
      %v415 = vld [vmem:[%s282 + $0x24] sm:$0xf]
      %v416 = vld [vmem:[%s282 + $0x28] sm:$0xf]
      %v417 = vld [vmem:[%s282 + $0x2c] sm:$0xf]
      %v418 = vld [vmem:[%s282 + $0x30] sm:$0xf]
      %v419 = vld [vmem:[%s282 + $0x34] sm:$0xf]
      %v420 = vld [vmem:[%s282 + $0x38] sm:$0xf]
      %v421 = vld [vmem:[%s282 + $0x3c] sm:$0xf]
      %v454 = vunpack.c.l.b16 %v374
      %v455 = vunpack.c.l.b16 %v375
      %v456 = vunpack.c.l.b16 %v376
      %v457 = vunpack.c.l.b16 %v377
      %v458 = vunpack.c.l.b16 %v378
      %v459 = vunpack.c.l.b16 %v379
      %v460 = vunpack.c.l.b16 %v380
      %v461 = vunpack.c.l.b16 %v381
      %v462 = vunpack.c.l.b16 %v382
      %v463 = vunpack.c.l.b16 %v383
      %v464 = vunpack.c.l.b16 %v384
      %v465 = vunpack.c.l.b16 %v385
      %v466 = vunpack.c.l.b16 %v386
      %v467 = vunpack.c.l.b16 %v387
      %v468 = vunpack.c.l.b16 %v388
      %v469 = vunpack.c.l.b16 %v389
      %v470 = vunpack.c.l.b16 %v390
      %v471 = vunpack.c.l.b16 %v391
      %v472 = vunpack.c.l.b16 %v392
      %v473 = vunpack.c.l.b16 %v393
      %v474 = vunpack.c.l.b16 %v394
      %v475 = vunpack.c.l.b16 %v395
      %v476 = vunpack.c.l.b16 %v396
      %v477 = vunpack.c.l.b16 %v397
      %v478 = vunpack.c.l.b16 %v398
      %v479 = vunpack.c.l.b16 %v399
      %v480 = vunpack.c.l.b16 %v400
      %v481 = vunpack.c.l.b16 %v401
      %v482 = vunpack.c.l.b16 %v402
      %v483 = vunpack.c.l.b16 %v403
      %v484 = vunpack.c.l.b16 %v404
      %v485 = vunpack.c.l.b16 %v405
      %v486 = vpack.c.b16 %v455, %v454
      %v487 = vpack.c.b16 %v457, %v456
      %v488 = vpack.c.b16 %v459, %v458
      %v489 = vpack.c.b16 %v461, %v460
      %v490 = vpack.c.b16 %v463, %v462
      %v491 = vpack.c.b16 %v465, %v464
      %v492 = vpack.c.b16 %v467, %v466
      %v493 = vpack.c.b16 %v469, %v468
      %v494 = vpack.c.b16 %v471, %v470
      %v495 = vpack.c.b16 %v473, %v472
      %v496 = vpack.c.b16 %v475, %v474
      %v497 = vpack.c.b16 %v477, %v476
      %v498 = vpack.c.b16 %v479, %v478
      %v499 = vpack.c.b16 %v481, %v480
      %v500 = vpack.c.b16 %v483, %v482
      %v501 = vpack.c.b16 %v485, %v484
      %v534 = vunpack.c.l.b16 %v406
      %v535 = vunpack.c.l.b16 %v407
      %v536 = vunpack.c.l.b16 %v408
      %v537 = vunpack.c.l.b16 %v409
      %v538 = vunpack.c.l.b16 %v410
      %v539 = vunpack.c.l.b16 %v411
      %v540 = vunpack.c.l.b16 %v412
      %v541 = vunpack.c.l.b16 %v413
      %v542 = vunpack.c.l.b16 %v414
      %v543 = vunpack.c.l.b16 %v415
      %v544 = vunpack.c.l.b16 %v416
      %v545 = vunpack.c.l.b16 %v417
      %v546 = vunpack.c.l.b16 %v418
      %v547 = vunpack.c.l.b16 %v419
      %v548 = vunpack.c.l.b16 %v420
      %v549 = vunpack.c.l.b16 %v421
      %v550 = vpack.c.b16 %v535, %v534
      %v551 = vpack.c.b16 %v537, %v536
      %v552 = vpack.c.b16 %v539, %v538
      %v553 = vpack.c.b16 %v541, %v540
      %v554 = vpack.c.b16 %v543, %v542
      %v555 = vpack.c.b16 %v545, %v544
      %v556 = vpack.c.b16 %v547, %v546
      %v557 = vpack.c.b16 %v549, %v548
      %566 = vmatprep.subr.bf16.mxu0 0
      %567 = vmatpush1.bf16.msra.mxu0 %v550
      %568 = vmatprep.subr.bf16.mxu0 0
      %569 = vmatpush1.bf16.msra.mxu0 %v551
      %570 = vmatprep.subr.bf16.mxu0 0
      %571 = vmatpush1.bf16.msra.mxu0 %v552
      %572 = vmatprep.subr.bf16.mxu0 0
      %573 = vmatpush1.bf16.msra.mxu0 %v553
      %574 = vmatprep.subr.bf16.mxu0 0
      %575 = vmatpush1.bf16.msra.mxu0 %v554
      %576 = vmatprep.subr.bf16.mxu0 0
      %577 = vmatpush1.bf16.msra.mxu0 %v555
      %578 = vmatprep.subr.bf16.mxu0 0
      %579 = vmatpush1.bf16.msra.mxu0 %v556
      %580 = vmatprep.subr.bf16.mxu0 0
      %581 = vmatpush1.bf16.msra.mxu0 %v557
      %582 = vmatprep.subr.bf16.mxu0 0
      %583 = vmatpush1.bf16.msra.mxu0 0
      %584 = vmatprep.subr.bf16.mxu0 0
      %585 = vmatpush1.bf16.msra.mxu0 0
      %586 = vmatprep.subr.bf16.mxu0 0
      %587 = vmatpush1.bf16.msra.mxu0 0
      %588 = vmatprep.subr.bf16.mxu0 0
      %589 = vmatpush1.bf16.msra.mxu0 0
      %590 = vmatprep.subr.bf16.mxu0 0
      %591 = vmatpush1.bf16.msra.mxu0 0
      %592 = vmatprep.subr.bf16.mxu0 0
      %593 = vmatpush1.bf16.msra.mxu0 0
      %594 = vmatprep.subr.bf16.mxu0 0
      %595 = vmatpush1.bf16.msra.mxu0 0
      %596 = vmatprep.subr.bf16.mxu0 0
      %597 = vmatpush1.bf16.msra.mxu0 0
      %598 = vmatprep.mubr.bf16.mxu0 0
      %599 = vmatmul.mubr.bf16.gmra.mrb[0].mxu0 %v486
      %v600 = vpop.f32.mrb[0].mxu0
      %v601 = vadd.f32 0.0, %v600
      %v602 = vpop.f32.mrb[0].mxu0
      %v603 = vpop.f32.mrb[0].mxu0
      %v604 = vadd.f32 0.0, %v603
      %v605 = vpop.f32.mrb[0].mxu0
      %606 = vmatprep.mubr.bf16.mxu0 0
      %607 = vmatmul.mubr.bf16.gmra.mrb[0].mxu0 %v487
      %v608 = vpop.f32.mrb[0].mxu0
      %v609 = vadd.f32 0.0, %v608
      %v610 = vpop.f32.mrb[0].mxu0
      %v611 = vpop.f32.mrb[0].mxu0
      %v612 = vadd.f32 0.0, %v611
      %v613 = vpop.f32.mrb[0].mxu0
      %614 = vmatprep.mubr.bf16.mxu0 0
      %615 = vmatmul.mubr.bf16.gmra.mrb[0].mxu0 %v488
      %v616 = vpop.f32.mrb[0].mxu0
      %v617 = vadd.f32 0.0, %v616
      %v618 = vpop.f32.mrb[0].mxu0
      %v619 = vpop.f32.mrb[0].mxu0
      %v620 = vadd.f32 0.0, %v619
      %v621 = vpop.f32.mrb[0].mxu0
      %622 = vmatprep.mubr.bf16.mxu0 0
      %623 = vmatmul.mubr.bf16.gmra.mrb[0].mxu0 %v489
      %v624 = vpop.f32.mrb[0].mxu0
      %v625 = vadd.f32 0.0, %v624
      %v626 = vpop.f32.mrb[0].mxu0
      %v627 = vpop.f32.mrb[0].mxu0
      %v628 = vadd.f32 0.0, %v627
      %v629 = vpop.f32.mrb[0].mxu0
      %630 = vmatprep.mubr.bf16.mxu0 0
      %631 = vmatmul.mubr.bf16.gmra.mrb[0].mxu0 %v490
      %v632 = vpop.f32.mrb[0].mxu0
      %v633 = vadd.f32 0.0, %v632
      %v634 = vpop.f32.mrb[0].mxu0
      %v635 = vpop.f32.mrb[0].mxu0
      %v636 = vadd.f32 0.0, %v635
      %v637 = vpop.f32.mrb[0].mxu0
      %638 = vmatprep.mubr.bf16.mxu0 0
      %639 = vmatmul.mubr.bf16.gmra.mrb[0].mxu0 %v491
      %v640 = vpop.f32.mrb[0].mxu0
      %v641 = vadd.f32 0.0, %v640
      %v642 = vpop.f32.mrb[0].mxu0
      %v643 = vpop.f32.mrb[0].mxu0
      %v644 = vadd.f32 0.0, %v643
      %v645 = vpop.f32.mrb[0].mxu0
      %646 = vmatprep.mubr.bf16.mxu0 0
      %647 = vmatmul.mubr.bf16.gmra.mrb[0].mxu0 %v492
      %v648 = vpop.f32.mrb[0].mxu0
      %v649 = vadd.f32 0.0, %v648
      %v650 = vpop.f32.mrb[0].mxu0
      %v651 = vpop.f32.mrb[0].mxu0
      %v652 = vadd.f32 0.0, %v651
      %v653 = vpop.f32.mrb[0].mxu0
      %654 = vmatprep.mubr.bf16.mxu0 0
      %655 = vmatmul.mubr.bf16.gmra.mrb[0].mxu0 %v493
      %v656 = vpop.f32.mrb[0].mxu0
      %v657 = vadd.f32 0.0, %v656
      %v658 = vpop.f32.mrb[0].mxu0
      %v659 = vpop.f32.mrb[0].mxu0
      %v660 = vadd.f32 0.0, %v659
      %v661 = vpop.f32.mrb[0].mxu0
      %662 = vmatprep.mubr.bf16.mxu0 0
      %663 = vmatmul.mubr.bf16.gmra.mrb[0].mxu0 %v494
      %v664 = vpop.f32.mrb[0].mxu0
      %v665 = vadd.f32 0.0, %v664
      %v666 = vpop.f32.mrb[0].mxu0
      %v667 = vpop.f32.mrb[0].mxu0
      %v668 = vadd.f32 0.0, %v667
      %v669 = vpop.f32.mrb[0].mxu0
      %670 = vmatprep.mubr.bf16.mxu0 0
      %671 = vmatmul.mubr.bf16.gmra.mrb[0].mxu0 %v495
      %v672 = vpop.f32.mrb[0].mxu0
      %v673 = vadd.f32 0.0, %v672
      %v674 = vpop.f32.mrb[0].mxu0
      %v675 = vpop.f32.mrb[0].mxu0
      %v676 = vadd.f32 0.0, %v675
      %v677 = vpop.f32.mrb[0].mxu0
      %678 = vmatprep.mubr.bf16.mxu0 0
      %679 = vmatmul.mubr.bf16.gmra.mrb[0].mxu0 %v496
      %v680 = vpop.f32.mrb[0].mxu0
      %v681 = vadd.f32 0.0, %v680
      %v682 = vpop.f32.mrb[0].mxu0
      %v683 = vpop.f32.mrb[0].mxu0
      %v684 = vadd.f32 0.0, %v683
      %v685 = vpop.f32.mrb[0].mxu0
      %686 = vmatprep.mubr.bf16.mxu0 0
      %687 = vmatmul.mubr.bf16.gmra.mrb[0].mxu0 %v497
      %v688 = vpop.f32.mrb[0].mxu0
      %v689 = vadd.f32 0.0, %v688
      %v690 = vpop.f32.mrb[0].mxu0
      %v691 = vpop.f32.mrb[0].mxu0
      %v692 = vadd.f32 0.0, %v691
      %v693 = vpop.f32.mrb[0].mxu0
      %694 = vmatprep.mubr.bf16.mxu0 0
      %695 = vmatmul.mubr.bf16.gmra.mrb[0].mxu0 %v498
      %v696 = vpop.f32.mrb[0].mxu0
      %v697 = vadd.f32 0.0, %v696
      %v698 = vpop.f32.mrb[0].mxu0
      %v699 = vpop.f32.mrb[0].mxu0
      %v700 = vadd.f32 0.0, %v699
      %v701 = vpop.f32.mrb[0].mxu0
      %702 = vmatprep.mubr.bf16.mxu0 0
      %703 = vmatmul.mubr.bf16.gmra.mrb[0].mxu0 %v499
      %v704 = vpop.f32.mrb[0].mxu0
      %v705 = vadd.f32 0.0, %v704
      %v706 = vpop.f32.mrb[0].mxu0
      %v707 = vpop.f32.mrb[0].mxu0
      %v708 = vadd.f32 0.0, %v707
      %v709 = vpop.f32.mrb[0].mxu0
      %710 = vmatprep.mubr.bf16.mxu0 0
      %711 = vmatmul.mubr.bf16.gmra.mrb[0].mxu0 %v500
      %v712 = vpop.f32.mrb[0].mxu0
      %v713 = vadd.f32 0.0, %v712
      %v714 = vpop.f32.mrb[0].mxu0
      %v715 = vpop.f32.mrb[0].mxu0
      %v716 = vadd.f32 0.0, %v715
      %v717 = vpop.f32.mrb[0].mxu0
      %718 = vmatprep.mubr.bf16.mxu0 0
      %719 = vmatmul.mubr.bf16.gmra.mrb[0].mxu0 %v501
      %v720 = vpop.f32.mrb[0].mxu0
      %v721 = vadd.f32 0.0, %v720
      %v722 = vpop.f32.mrb[0].mxu0
      %v723 = vpop.f32.mrb[0].mxu0
      %v724 = vadd.f32 0.0, %v723
      %v725 = vpop.f32.mrb[0].mxu0
      %726 = vdwg.mxu0
      %v727 = vadd.f32 %v342, %v601
      %v728 = vadd.f32 %v343, %v604
      %v729 = vadd.f32 %v344, %v609
      %v730 = vadd.f32 %v345, %v612
      %v731 = vadd.f32 %v346, %v617
      %v732 = vadd.f32 %v347, %v620
      %v733 = vadd.f32 %v348, %v625
      %v734 = vadd.f32 %v349, %v628
      %v735 = vadd.f32 %v350, %v633
      %v736 = vadd.f32 %v351, %v636
      %v737 = vadd.f32 %v352, %v641
      %v738 = vadd.f32 %v353, %v644
      %v739 = vadd.f32 %v354, %v649
      %v740 = vadd.f32 %v355, %v652
      %v741 = vadd.f32 %v356, %v657
      %v742 = vadd.f32 %v357, %v660
      %v743 = vadd.f32 %v358, %v665
      %v744 = vadd.f32 %v359, %v668
      %v745 = vadd.f32 %v360, %v673
      %v746 = vadd.f32 %v361, %v676
      %v747 = vadd.f32 %v362, %v681
      %v748 = vadd.f32 %v363, %v684
      %v749 = vadd.f32 %v364, %v689
      %v750 = vadd.f32 %v365, %v692
      %v751 = vadd.f32 %v366, %v697
      %v752 = vadd.f32 %v367, %v700
      %v753 = vadd.f32 %v368, %v705
      %v754 = vadd.f32 %v369, %v708
      %v755 = vadd.f32 %v370, %v713
      %v756 = vadd.f32 %v371, %v716
      %v757 = vadd.f32 %v372, %v721
      %v758 = vadd.f32 %v373, %v724
      %759 = vst [vmem:[#allocation2] sm:$0xff] %v727
      %760 = vst [vmem:[#allocation2 + $0x8] sm:$0xff] %v728
      %761 = vst [vmem:[#allocation2 + $0x10] sm:$0xff] %v729
      %762 = vst [vmem:[#allocation2 + $0x18] sm:$0xff] %v730
      %763 = vst [vmem:[#allocation2 + $0x20] sm:$0xff] %v731
      %764 = vst [vmem:[#allocation2 + $0x28] sm:$0xff] %v732
      %765 = vst [vmem:[#allocation2 + $0x30] sm:$0xff] %v733
      %766 = vst [vmem:[#allocation2 + $0x38] sm:$0xff] %v734
      %767 = vst [vmem:[#allocation2 + $0x40] sm:$0xff] %v735
      %768 = vst [vmem:[#allocation2 + $0x48] sm:$0xff] %v736
      %769 = vst [vmem:[#allocation2 + $0x50] sm:$0xff] %v737
      %770 = vst [vmem:[#allocation2 + $0x58] sm:$0xff] %v738
      %771 = vst [vmem:[#allocation2 + $0x60] sm:$0xff] %v739
      %772 = vst [vmem:[#allocation2 + $0x68] sm:$0xff] %v740
      %773 = vst [vmem:[#allocation2 + $0x70] sm:$0xff] %v741
      %774 = vst [vmem:[#allocation2 + $0x78] sm:$0xff] %v742
      %775 = vst [vmem:[#allocation2 + $0x80] sm:$0xff] %v743
      %776 = vst [vmem:[#allocation2 + $0x88] sm:$0xff] %v744
      %777 = vst [vmem:[#allocation2 + $0x90] sm:$0xff] %v745
      %778 = vst [vmem:[#allocation2 + $0x98] sm:$0xff] %v746
      %779 = vst [vmem:[#allocation2 + $0xa0] sm:$0xff] %v747
      %780 = vst [vmem:[#allocation2 + $0xa8] sm:$0xff] %v748
      %781 = vst [vmem:[#allocation2 + $0xb0] sm:$0xff] %v749
      %782 = vst [vmem:[#allocation2 + $0xb8] sm:$0xff] %v750
      %783 = vst [vmem:[#allocation2 + $0xc0] sm:$0xff] %v751
      %784 = vst [vmem:[#allocation2 + $0xc8] sm:$0xff] %v752
      %785 = vst [vmem:[#allocation2 + $0xd0] sm:$0xff] %v753
      %786 = vst [vmem:[#allocation2 + $0xd8] sm:$0xff] %v754
      %787 = vst [vmem:[#allocation2 + $0xe0] sm:$0xff] %v755
      %788 = vst [vmem:[#allocation2 + $0xe8] sm:$0xff] %v756
      %789 = vst [vmem:[#allocation2 + $0xf0] sm:$0xff] %v757
      %790 = vst [vmem:[#allocation2 + $0xf8] sm:$0xff] %v758
      // Predicated region
      $region33: #{discrim_block_forward.4} parent=27 // pred_check
        %p791 = pneg %p306
      $region34: #{discrim_block_forward.4} parent=27 // pred_check_branch
        %793 = sbr.rel (%p791) target = $region36
      $region35: #{discrim_block_forward.4} parent=27 // pred_region
        %v794 = vld [vmem:[#allocation2] sm:$0xff]
        %v795 = vld [vmem:[#allocation2 + $0x8] sm:$0xff]
        %v796 = vld [vmem:[#allocation2 + $0x10] sm:$0xff]
        %v797 = vld [vmem:[#allocation2 + $0x18] sm:$0xff]
        %v798 = vld [vmem:[#allocation2 + $0x20] sm:$0xff]
        %v799 = vld [vmem:[#allocation2 + $0x28] sm:$0xff]
        %v800 = vld [vmem:[#allocation2 + $0x30] sm:$0xff]
        %v801 = vld [vmem:[#allocation2 + $0x38] sm:$0xff]
        %v802 = vld [vmem:[#allocation2 + $0x40] sm:$0xff]
        %v803 = vld [vmem:[#allocation2 + $0x48] sm:$0xff]
        %v804 = vld [vmem:[#allocation2 + $0x50] sm:$0xff]
        %v805 = vld [vmem:[#allocation2 + $0x58] sm:$0xff]
        %v806 = vld [vmem:[#allocation2 + $0x60] sm:$0xff]
        %v807 = vld [vmem:[#allocation2 + $0x68] sm:$0xff]
        %v808 = vld [vmem:[#allocation2 + $0x70] sm:$0xff]
        %v809 = vld [vmem:[#allocation2 + $0x78] sm:$0xff]
        %v810 = vld [vmem:[#allocation2 + $0x80] sm:$0xff]
        %v811 = vld [vmem:[#allocation2 + $0x88] sm:$0xff]
        %v812 = vld [vmem:[#allocation2 + $0x90] sm:$0xff]
        %v813 = vld [vmem:[#allocation2 + $0x98] sm:$0xff]
        %v814 = vld [vmem:[#allocation2 + $0xa0] sm:$0xff]
        %v815 = vld [vmem:[#allocation2 + $0xa8] sm:$0xff]
        %v816 = vld [vmem:[#allocation2 + $0xb0] sm:$0xff]
        %v817 = vld [vmem:[#allocation2 + $0xb8] sm:$0xff]
        %v818 = vld [vmem:[#allocation2 + $0xc0] sm:$0xff]
        %v819 = vld [vmem:[#allocation2 + $0xc8] sm:$0xff]
        %v820 = vld [vmem:[#allocation2 + $0xd0] sm:$0xff]
        %v821 = vld [vmem:[#allocation2 + $0xd8] sm:$0xff]
        %v822 = vld [vmem:[#allocation2 + $0xe0] sm:$0xff]
        %v823 = vld [vmem:[#allocation2 + $0xe8] sm:$0xff]
        %v824 = vld [vmem:[#allocation2 + $0xf0] sm:$0xff]
        %v825 = vld [vmem:[#allocation2 + $0xf8] sm:$0xff]
        %v826 = vpack.c.bf16 %v795, %v794
        %v827 = vpack.c.bf16 %v797, %v796
        %v828 = vpack.c.bf16 %v799, %v798
        %v829 = vpack.c.bf16 %v801, %v800
        %v830 = vpack.c.bf16 %v803, %v802
        %v831 = vpack.c.bf16 %v805, %v804
        %v832 = vpack.c.bf16 %v807, %v806
        %v833 = vpack.c.bf16 %v809, %v808
        %v834 = vpack.c.bf16 %v811, %v810
        %v835 = vpack.c.bf16 %v813, %v812
        %v836 = vpack.c.bf16 %v815, %v814
        %v837 = vpack.c.bf16 %v817, %v816
        %v838 = vpack.c.bf16 %v819, %v818
        %v839 = vpack.c.bf16 %v821, %v820
        %v840 = vpack.c.bf16 %v823, %v822
        %v841 = vpack.c.bf16 %v825, %v824
        %v858 = vunpack.c.l.b16 %v826
        %v859 = vunpack.c.h.b16 %v826
        %v860 = vunpack.c.l.b16 %v827
        %v861 = vunpack.c.h.b16 %v827
        %v862 = vunpack.c.l.b16 %v828
        %v863 = vunpack.c.h.b16 %v828
        %v864 = vunpack.c.l.b16 %v829
        %v865 = vunpack.c.h.b16 %v829
        %v866 = vunpack.c.l.b16 %v830
        %v867 = vunpack.c.h.b16 %v830
        %v868 = vunpack.c.l.b16 %v831
        %v869 = vunpack.c.h.b16 %v831
        %v870 = vunpack.c.l.b16 %v832
        %v871 = vunpack.c.h.b16 %v832
        %v872 = vunpack.c.l.b16 %v833
        %v873 = vunpack.c.h.b16 %v833
        %v874 = vunpack.c.l.b16 %v834
        %v875 = vunpack.c.h.b16 %v834
        %v876 = vunpack.c.l.b16 %v835
        %v877 = vunpack.c.h.b16 %v835
        %v878 = vunpack.c.l.b16 %v836
        %v879 = vunpack.c.h.b16 %v836
        %v880 = vunpack.c.l.b16 %v837
        %v881 = vunpack.c.h.b16 %v837
        %v882 = vunpack.c.l.b16 %v838
        %v883 = vunpack.c.h.b16 %v838
        %v884 = vunpack.c.l.b16 %v839
        %v885 = vunpack.c.h.b16 %v839
        %v886 = vunpack.c.l.b16 %v840
        %v887 = vunpack.c.h.b16 %v840
        %v888 = vunpack.c.l.b16 %v841
        %v889 = vunpack.c.h.b16 %v841
        %v890 = vpack.c.b16 %v858, %v858
        %v891 = vpack.c.b16 %v859, %v859
        %v892 = vpack.c.b16 %v860, %v860
        %v893 = vpack.c.b16 %v861, %v861
        %v894 = vpack.c.b16 %v862, %v862
        %v895 = vpack.c.b16 %v863, %v863
        %v896 = vpack.c.b16 %v864, %v864
        %v897 = vpack.c.b16 %v865, %v865
        %v898 = vpack.c.b16 %v866, %v866
        %v899 = vpack.c.b16 %v867, %v867
        %v900 = vpack.c.b16 %v868, %v868
        %v901 = vpack.c.b16 %v869, %v869
        %v902 = vpack.c.b16 %v870, %v870
        %v903 = vpack.c.b16 %v871, %v871
        %v904 = vpack.c.b16 %v872, %v872
        %v905 = vpack.c.b16 %v873, %v873
        %v906 = vpack.c.b16 %v874, %v874
        %v907 = vpack.c.b16 %v875, %v875
        %v908 = vpack.c.b16 %v876, %v876
        %v909 = vpack.c.b16 %v877, %v877
        %v910 = vpack.c.b16 %v878, %v878
        %v911 = vpack.c.b16 %v879, %v879
        %v912 = vpack.c.b16 %v880, %v880
        %v913 = vpack.c.b16 %v881, %v881
        %v914 = vpack.c.b16 %v882, %v882
        %v915 = vpack.c.b16 %v883, %v883
        %v916 = vpack.c.b16 %v884, %v884
        %v917 = vpack.c.b16 %v885, %v885
        %v918 = vpack.c.b16 %v886, %v886
        %v919 = vpack.c.b16 %v887, %v887
        %v920 = vpack.c.b16 %v888, %v888
        %v921 = vpack.c.b16 %v889, %v889
        %954 = vst [vmem:[%s291] sm:$0xf] %v890
        %955 = vst [vmem:[%s291 + $0x4] sm:$0xf] %v891
        %956 = vst [vmem:[%s291 + $0x8] sm:$0xf] %v892
        %957 = vst [vmem:[%s291 + $0xc] sm:$0xf] %v893
        %958 = vst [vmem:[%s291 + $0x10] sm:$0xf] %v894
        %959 = vst [vmem:[%s291 + $0x14] sm:$0xf] %v895
        %960 = vst [vmem:[%s291 + $0x18] sm:$0xf] %v896
        %961 = vst [vmem:[%s291 + $0x1c] sm:$0xf] %v897
        %962 = vst [vmem:[%s291 + $0x20] sm:$0xf] %v898
        %963 = vst [vmem:[%s291 + $0x24] sm:$0xf] %v899
        %964 = vst [vmem:[%s291 + $0x28] sm:$0xf] %v900
        %965 = vst [vmem:[%s291 + $0x2c] sm:$0xf] %v901
        %966 = vst [vmem:[%s291 + $0x30] sm:$0xf] %v902
        %967 = vst [vmem:[%s291 + $0x34] sm:$0xf] %v903
        %968 = vst [vmem:[%s291 + $0x38] sm:$0xf] %v904
        %969 = vst [vmem:[%s291 + $0x3c] sm:$0xf] %v905
        %970 = vst [vmem:[%s291 + $0x40] sm:$0xf] %v906
        %971 = vst [vmem:[%s291 + $0x44] sm:$0xf] %v907
        %972 = vst [vmem:[%s291 + $0x48] sm:$0xf] %v908
        %973 = vst [vmem:[%s291 + $0x4c] sm:$0xf] %v909
        %974 = vst [vmem:[%s291 + $0x50] sm:$0xf] %v910
        %975 = vst [vmem:[%s291 + $0x54] sm:$0xf] %v911
        %976 = vst [vmem:[%s291 + $0x58] sm:$0xf] %v912
        %977 = vst [vmem:[%s291 + $0x5c] sm:$0xf] %v913
        %978 = vst [vmem:[%s291 + $0x60] sm:$0xf] %v914
        %979 = vst [vmem:[%s291 + $0x64] sm:$0xf] %v915
        %980 = vst [vmem:[%s291 + $0x68] sm:$0xf] %v916
        %981 = vst [vmem:[%s291 + $0x6c] sm:$0xf] %v917
        %982 = vst [vmem:[%s291 + $0x70] sm:$0xf] %v918
        %983 = vst [vmem:[%s291 + $0x74] sm:$0xf] %v919
        %984 = vst [vmem:[%s291 + $0x78] sm:$0xf] %v920
        %985 = vst [vmem:[%s291 + $0x7c] sm:$0xf] %v921
        %v986 = vadd.f32 %v794, %v795
        %v987 = vadd.f32 %v986, %v796
        %v988 = vadd.f32 %v987, %v797
        %v989 = vadd.f32 %v988, %v798
        %v990 = vadd.f32 %v989, %v799
        %v991 = vadd.f32 %v990, %v800
        %v992 = vadd.f32 %v991, %v801
        %v993 = vadd.f32 %v992, %v802
        %v994 = vadd.f32 %v993, %v803
        %v995 = vadd.f32 %v994, %v804
        %v996 = vadd.f32 %v995, %v805
        %v997 = vadd.f32 %v996, %v806
        %v998 = vadd.f32 %v997, %v807
        %v999 = vadd.f32 %v998, %v808
        %v1000 = vadd.f32 %v999, %v809
        %v1001 = vadd.f32 %v1000, %v810
        %v1002 = vadd.f32 %v1001, %v811
        %v1003 = vadd.f32 %v1002, %v812
        %v1004 = vadd.f32 %v1003, %v813
        %v1005 = vadd.f32 %v1004, %v814
        %v1006 = vadd.f32 %v1005, %v815
        %v1007 = vadd.f32 %v1006, %v816
        %v1008 = vadd.f32 %v1007, %v817
        %v1009 = vadd.f32 %v1008, %v818
        %v1010 = vadd.f32 %v1009, %v819
        %v1011 = vadd.f32 %v1010, %v820
        %v1012 = vadd.f32 %v1011, %v821
        %v1013 = vadd.f32 %v1012, %v822
        %v1014 = vadd.f32 %v1013, %v823
        %v1015 = vadd.f32 %v1014, %v824
        %v1016 = vadd.f32 %v1015, %v825
        %v1017 = vrot.slane %v1016, 4
        %v1018 = vadd.f32 %v1016, %v1017
        %v1019 = vrot.slane %v1018, 2
        %v1020 = vadd.f32 %v1018, %v1019
        %v1021 = vrot.slane %v1020, 1
        %v1022 = vadd.f32 %v1020, %v1021
        %1023 = vst [vmem:[%s298] sm:$0x1] %v1022
        %v1024 = vmul.f32 %v794, %v794
        %v1025 = vmul.f32 %v795, %v795
        %v1026 = vmul.f32 %v796, %v796
        %v1027 = vmul.f32 %v797, %v797
        %v1028 = vmul.f32 %v798, %v798
        %v1029 = vmul.f32 %v799, %v799
        %v1030 = vmul.f32 %v800, %v800
        %v1031 = vmul.f32 %v801, %v801
        %v1032 = vmul.f32 %v802, %v802
        %v1033 = vmul.f32 %v803, %v803
        %v1034 = vmul.f32 %v804, %v804
        %v1035 = vmul.f32 %v805, %v805
        %v1036 = vmul.f32 %v806, %v806
        %v1037 = vmul.f32 %v807, %v807
        %v1038 = vmul.f32 %v808, %v808
        %v1039 = vmul.f32 %v809, %v809
        %v1040 = vmul.f32 %v810, %v810
        %v1041 = vmul.f32 %v811, %v811
        %v1042 = vmul.f32 %v812, %v812
        %v1043 = vmul.f32 %v813, %v813
        %v1044 = vmul.f32 %v814, %v814
        %v1045 = vmul.f32 %v815, %v815
        %v1046 = vmul.f32 %v816, %v816
        %v1047 = vmul.f32 %v817, %v817
        %v1048 = vmul.f32 %v818, %v818
        %v1049 = vmul.f32 %v819, %v819
        %v1050 = vmul.f32 %v820, %v820
        %v1051 = vmul.f32 %v821, %v821
        %v1052 = vmul.f32 %v822, %v822
        %v1053 = vmul.f32 %v823, %v823
        %v1054 = vmul.f32 %v824, %v824
        %v1055 = vmul.f32 %v825, %v825
        %v1056 = vadd.f32 %v1024, %v1025
        %v1057 = vadd.f32 %v1056, %v1026
        %v1058 = vadd.f32 %v1057, %v1027
        %v1059 = vadd.f32 %v1058, %v1028
        %v1060 = vadd.f32 %v1059, %v1029
        %v1061 = vadd.f32 %v1060, %v1030
        %v1062 = vadd.f32 %v1061, %v1031
        %v1063 = vadd.f32 %v1062, %v1032
        %v1064 = vadd.f32 %v1063, %v1033
        %v1065 = vadd.f32 %v1064, %v1034
        %v1066 = vadd.f32 %v1065, %v1035
        %v1067 = vadd.f32 %v1066, %v1036
        %v1068 = vadd.f32 %v1067, %v1037
        %v1069 = vadd.f32 %v1068, %v1038
        %v1070 = vadd.f32 %v1069, %v1039
        %v1071 = vadd.f32 %v1070, %v1040
        %v1072 = vadd.f32 %v1071, %v1041
        %v1073 = vadd.f32 %v1072, %v1042
        %v1074 = vadd.f32 %v1073, %v1043
        %v1075 = vadd.f32 %v1074, %v1044
        %v1076 = vadd.f32 %v1075, %v1045
        %v1077 = vadd.f32 %v1076, %v1046
        %v1078 = vadd.f32 %v1077, %v1047
        %v1079 = vadd.f32 %v1078, %v1048
        %v1080 = vadd.f32 %v1079, %v1049
        %v1081 = vadd.f32 %v1080, %v1050
        %v1082 = vadd.f32 %v1081, %v1051
        %v1083 = vadd.f32 %v1082, %v1052
        %v1084 = vadd.f32 %v1083, %v1053
        %v1085 = vadd.f32 %v1084, %v1054
        %v1086 = vadd.f32 %v1085, %v1055
        %v1087 = vrot.slane %v1086, 4
        %v1088 = vadd.f32 %v1086, %v1087
        %v1089 = vrot.slane %v1088, 2
        %v1090 = vadd.f32 %v1088, %v1089
        %v1091 = vrot.slane %v1090, 1
        %v1092 = vadd.f32 %v1090, %v1091
        %1093 = vst [vmem:[%s304] sm:$0x1] %v1092
      $region36: #{discrim_block_forward.4} parent=27 // pred_fallthru
        _
      %s1094 = smul.u32 32, %s21
      %p1095 = scmp.lt.s32.totalorder %s1094, 63
      %s1096 = scalar_select %p1095, %s1094, 63
      %p1097 = scmp.lt.s32.totalorder %s22, 0
      %s1098 = scalar_select %p1097, %s22, 0
      %s1099 = sadd.s32 %s1098, %s1096
      %s1100 = smul.addr %s1099, 4
      %s1101 = scalar_lea.vmem %s2, %s1100
      %p1102 = scmp.lt.s32.totalorder %s21, 1
      %s1103 = scalar_select %p1102, %s21, 1
      %p1104 = scmp.lt.s32.totalorder %s22, 0
      %s1105 = scalar_select %p1104, %s22, 0
      %s1106 = sadd.s32 %s1105, %s1103
      %s1107 = scalar_lea.vmem %s3, %s1106
      %p1108 = scmp.lt.s32.totalorder %s21, 1
      %s1109 = scalar_select %p1108, %s21, 1
      %p1110 = scmp.lt.s32.totalorder %s22, 0
      %s1111 = scalar_select %p1110, %s22, 0
      %s1112 = sadd.s32 %s1111, %s1109
      %s1113 = scalar_lea.vmem %s4, %s1112
      // Predicated region
      $region37: #{discrim_block_forward.4} parent=27 // pred_check
        %p1114 = pneg %p111
      $region38: #{discrim_block_forward.4} parent=27 // pred_check_branch
        %1116 = sbr.rel (%p1114) target = $region40
      $region39: #{discrim_block_forward.4} parent=27 // pred_region
        %s1117 = smul.u32 32, %s21
      $region40: #{discrim_block_forward.4} parent=27 // pred_fallthru
        _
      // Predicated region
      $region41: #{discrim_block_forward.4} parent=27 // pred_check
        %p1118 = pneg %p139
      $region42: #{discrim_block_forward.4} parent=27 // pred_check_branch
        %1120 = sbr.rel (%p1118) target = $region44
      $region43: #{discrim_block_forward.4} parent=27 // pred_region
        _
      $region44: #{discrim_block_forward.4} parent=27 // pred_fallthru
        _
      // Predicated region
      $region45: #{discrim_block_forward.4} parent=27 // pred_check
        %p1121 = pneg %p167
      $region46: #{discrim_block_forward.4} parent=27 // pred_check_branch
        %1123 = sbr.rel (%p1121) target = $region48
      $region47: #{discrim_block_forward.4} parent=27 // pred_region
        _
      $region48: #{discrim_block_forward.4} parent=27 // pred_fallthru
        _
    $region28: #{discrim_block_forward.4} parent=5 // pred_fallthru
      _
    %p1124 = scmp.le.s32.totalorder 2, %s11
    // Predicated region
    $region49: #{discrim_block_forward.4} parent=5 // pred_check
      %p1125 = pneg %p1124
    $region50: #{discrim_block_forward.4} parent=5 // pred_check_branch
      %1127 = sbr.rel (%p1125) target = $region52
    $region51: #{discrim_block_forward.4} parent=5 // pred_region
      %s1128 = ssub.s32 %s11, 2
      // Predicated region
      $region53: #{discrim_block_forward.4} parent=51 // pred_check
        %p1129 = pneg %p117
      $region54: #{discrim_block_forward.4} parent=51 // pred_check_branch
        %1131 = sbr.rel (%p1129) target = $region56
      $region55: #{discrim_block_forward.4} parent=51 // pred_region
        %s1132 = smul.u32 32, %s24
        %p1133 = scmp.lt.s32.totalorder %s1132, 63
        %s1134 = scalar_select %p1133, %s1132, 63
        %p1135 = scmp.lt.s32.totalorder %s25, 0
        %s1136 = scalar_select %p1135, %s25, 0
        %s1137 = sadd.s32 %s1136, %s1134
        %s1138 = smul.addr %s1137, 4
        %s1139 = scalar_lea.vmem %s2, %s1138
      $region56: #{discrim_block_forward.4} parent=51 // pred_fallthru
        _
      // Predicated region
      $region57: #{discrim_block_forward.4} parent=51 // pred_check
        %p1140 = pneg %p145
      $region58: #{discrim_block_forward.4} parent=51 // pred_check_branch
        %1142 = sbr.rel (%p1140) target = $region60
      $region59: #{discrim_block_forward.4} parent=51 // pred_region
        %p1143 = scmp.lt.s32.totalorder %s24, 1
        %s1144 = scalar_select %p1143, %s24, 1
        %p1145 = scmp.lt.s32.totalorder %s25, 0
        %s1146 = scalar_select %p1145, %s25, 0
        %s1147 = sadd.s32 %s1146, %s1144
        %s1148 = scalar_lea.vmem %s3, %s1147
      $region60: #{discrim_block_forward.4} parent=51 // pred_fallthru
        _
      // Predicated region
      $region61: #{discrim_block_forward.4} parent=51 // pred_check
        %p1149 = pneg %p173
      $region62: #{discrim_block_forward.4} parent=51 // pred_check_branch
        %1151 = sbr.rel (%p1149) target = $region64
      $region63: #{discrim_block_forward.4} parent=51 // pred_region
        %p1152 = scmp.lt.s32.totalorder %s24, 1
        %s1153 = scalar_select %p1152, %s24, 1
        %p1154 = scmp.lt.s32.totalorder %s25, 0
        %s1155 = scalar_select %p1154, %s25, 0
        %s1156 = sadd.s32 %s1155, %s1153
        %s1157 = scalar_lea.vmem %s4, %s1156
      $region64: #{discrim_block_forward.4} parent=51 // pred_fallthru
        _
    $region52: #{discrim_block_forward.4} parent=5 // pred_fallthru
      _
  $region6: #{discrim_block_forward.4} parent=0 // loop_footer
    %s15 = sadd.s32 1, %s11
  $region7: #{discrim_block_forward.4} parent=0 // loop_footer_branch
    %10 = sbr.rel target = $region3
  $region8: #{discrim_block_forward.4} parent=0 // loop_exit
    _

// kernel: discrim_block_forward.6
$region0: #{discrim_block_forward.6}
  #allocation0 [shape = 'u32[]', space=smem, size = 0x4, offset = 0x4, fixed_abs, tag = 'smem constant byte address 0x4 - core index']
  #allocation1 [shape = 'u32[144,128]{1,0:T(1,128)}', space=vmem, size = 0x12000, scoped, tag = 'internal scratch']
  #allocation2 [shape = 'f32[128,128]{1,0:T(8,128)}', space=vmem, size = 0x10000, scoped, tag = 'scratch operand']
  %s0 = inlined_call_operand.vmem [shape: bf16[128,128], index: 0, kind: input, shape index: {}]
  %s1 = inlined_call_operand.vmem [shape: bf16[128,128], index: 1, kind: input, shape index: {}]
  %s2 = inlined_call_operand.vmem [shape: bf16[128,128], index: 2, kind: output, shape index: {0}]
  %s3 = inlined_call_operand.vmem [shape: f32[1,1,128], index: 3, kind: output, shape index: {1}]
  %s4 = inlined_call_operand.vmem [shape: f32[1,1,128], index: 4, kind: output, shape index: {2}]
  %5 = xla_tuple %s2, %s3, %s4
  %s6 = sld [smem:[#allocation0]]
  $region42: #{discrim_block_forward.6} parent=0
    _
  %s8 = ssub.s32 1, %s6
  %s9 = scalar_select 0, %s8, %s6
  // Predicated region
  $region2: #{discrim_block_forward.6} parent=0 // pred_check
    _
  $region3: #{discrim_block_forward.6} parent=0 // pred_check_branch
    %11 = sbr.rel (0) target = $region5
  $region4: #{discrim_block_forward.6} parent=0 // pred_region
    _
  $region5: #{discrim_block_forward.6} parent=0 // pred_fallthru
    _
  // Predicated region
  $region6: #{discrim_block_forward.6} parent=0 // pred_check
    _
  $region7: #{discrim_block_forward.6} parent=0 // pred_check_branch
    %13 = sbr.rel (0) target = $region9
  $region8: #{discrim_block_forward.6} parent=0 // pred_region
    _
  $region9: #{discrim_block_forward.6} parent=0 // pred_fallthru
    _
  %p15 = scmp.eq.s32.totalorder 0, 0
  // Predicated region
  $region10: #{discrim_block_forward.6} parent=0 // pred_check
    %p16 = pneg %p15
  $region11: #{discrim_block_forward.6} parent=0 // pred_check_branch
    %18 = sbr.rel (%p16) target = $region13
  $region12: #{discrim_block_forward.6} parent=0 // pred_region
    %19 = vst [vmem:[#allocation2] sm:$0xff] 0.0
    %20 = vst [vmem:[#allocation2 + $0x8] sm:$0xff] 0.0
    %21 = vst [vmem:[#allocation2 + $0x10] sm:$0xff] 0.0
    %22 = vst [vmem:[#allocation2 + $0x18] sm:$0xff] 0.0
    %23 = vst [vmem:[#allocation2 + $0x20] sm:$0xff] 0.0
    %24 = vst [vmem:[#allocation2 + $0x28] sm:$0xff] 0.0
    %25 = vst [vmem:[#allocation2 + $0x30] sm:$0xff] 0.0
    %26 = vst [vmem:[#allocation2 + $0x38] sm:$0xff] 0.0
    %27 = vst [vmem:[#allocation2 + $0x40] sm:$0xff] 0.0
    %28 = vst [vmem:[#allocation2 + $0x48] sm:$0xff] 0.0
    %29 = vst [vmem:[#allocation2 + $0x50] sm:$0xff] 0.0
    %30 = vst [vmem:[#allocation2 + $0x58] sm:$0xff] 0.0
    %31 = vst [vmem:[#allocation2 + $0x60] sm:$0xff] 0.0
    %32 = vst [vmem:[#allocation2 + $0x68] sm:$0xff] 0.0
    %33 = vst [vmem:[#allocation2 + $0x70] sm:$0xff] 0.0
    %34 = vst [vmem:[#allocation2 + $0x78] sm:$0xff] 0.0
  $region13: #{discrim_block_forward.6} parent=0 // pred_fallthru
    _
  %v35 = vld [vmem:[#allocation2] sm:$0xff]
  %v36 = vld [vmem:[#allocation2 + $0x8] sm:$0xff]
  %v37 = vld [vmem:[#allocation2 + $0x10] sm:$0xff]
  %v38 = vld [vmem:[#allocation2 + $0x18] sm:$0xff]
  %v39 = vld [vmem:[#allocation2 + $0x20] sm:$0xff]
  %v40 = vld [vmem:[#allocation2 + $0x28] sm:$0xff]
  %v41 = vld [vmem:[#allocation2 + $0x30] sm:$0xff]
  %v42 = vld [vmem:[#allocation2 + $0x38] sm:$0xff]
  %v43 = vld [vmem:[#allocation2 + $0x40] sm:$0xff]
  %v44 = vld [vmem:[#allocation2 + $0x48] sm:$0xff]
  %v45 = vld [vmem:[#allocation2 + $0x50] sm:$0xff]
  %v46 = vld [vmem:[#allocation2 + $0x58] sm:$0xff]
  %v47 = vld [vmem:[#allocation2 + $0x60] sm:$0xff]
  %v48 = vld [vmem:[#allocation2 + $0x68] sm:$0xff]
  %v49 = vld [vmem:[#allocation2 + $0x70] sm:$0xff]
  %v50 = vld [vmem:[#allocation2 + $0x78] sm:$0xff]
  %v51 = vld [vmem:[%s0] sm:$0xf]
  %v52 = vld [vmem:[%s0 + $0x4] sm:$0xf]
  %v53 = vld [vmem:[%s0 + $0x8] sm:$0xf]
  %v54 = vld [vmem:[%s0 + $0xc] sm:$0xf]
  %v55 = vld [vmem:[%s0 + $0x10] sm:$0xf]
  %v56 = vld [vmem:[%s0 + $0x14] sm:$0xf]
  %v57 = vld [vmem:[%s0 + $0x18] sm:$0xf]
  %v58 = vld [vmem:[%s0 + $0x1c] sm:$0xf]
  %v59 = vld [vmem:[%s0 + $0x20] sm:$0xf]
  %v60 = vld [vmem:[%s0 + $0x24] sm:$0xf]
  %v61 = vld [vmem:[%s0 + $0x28] sm:$0xf]
  %v62 = vld [vmem:[%s0 + $0x2c] sm:$0xf]
  %v63 = vld [vmem:[%s0 + $0x30] sm:$0xf]
  %v64 = vld [vmem:[%s0 + $0x34] sm:$0xf]
  %v65 = vld [vmem:[%s0 + $0x38] sm:$0xf]
  %v66 = vld [vmem:[%s0 + $0x3c] sm:$0xf]
  %v67 = vld [vmem:[%s1] sm:$0xf]
  %v68 = vld [vmem:[%s1 + $0x4] sm:$0xf]
  %v69 = vld [vmem:[%s1 + $0x8] sm:$0xf]
  %v70 = vld [vmem:[%s1 + $0xc] sm:$0xf]
  %v71 = vld [vmem:[%s1 + $0x10] sm:$0xf]
  %v72 = vld [vmem:[%s1 + $0x14] sm:$0xf]
  %v73 = vld [vmem:[%s1 + $0x18] sm:$0xf]
  %v74 = vld [vmem:[%s1 + $0x1c] sm:$0xf]
  %v75 = vld [vmem:[%s1 + $0x20] sm:$0xf]
  %v76 = vld [vmem:[%s1 + $0x24] sm:$0xf]
  %v77 = vld [vmem:[%s1 + $0x28] sm:$0xf]
  %v78 = vld [vmem:[%s1 + $0x2c] sm:$0xf]
  %v79 = vld [vmem:[%s1 + $0x30] sm:$0xf]
  %v80 = vld [vmem:[%s1 + $0x34] sm:$0xf]
  %v81 = vld [vmem:[%s1 + $0x38] sm:$0xf]
  %v82 = vld [vmem:[%s1 + $0x3c] sm:$0xf]
  %v99 = vunpack.c.l.b16 %v51
  %v100 = vunpack.c.l.b16 %v52
  %v101 = vunpack.c.l.b16 %v53
  %v102 = vunpack.c.l.b16 %v54
  %v103 = vunpack.c.l.b16 %v55
  %v104 = vunpack.c.l.b16 %v56
  %v105 = vunpack.c.l.b16 %v57
  %v106 = vunpack.c.l.b16 %v58
  %v107 = vunpack.c.l.b16 %v59
  %v108 = vunpack.c.l.b16 %v60
  %v109 = vunpack.c.l.b16 %v61
  %v110 = vunpack.c.l.b16 %v62
  %v111 = vunpack.c.l.b16 %v63
  %v112 = vunpack.c.l.b16 %v64
  %v113 = vunpack.c.l.b16 %v65
  %v114 = vunpack.c.l.b16 %v66
  %v115 = vpack.c.b16 %v100, %v99
  %v116 = vpack.c.b16 %v102, %v101
  %v117 = vpack.c.b16 %v104, %v103
  %v118 = vpack.c.b16 %v106, %v105
  %v119 = vpack.c.b16 %v108, %v107
  %v120 = vpack.c.b16 %v110, %v109
  %v121 = vpack.c.b16 %v112, %v111
  %v122 = vpack.c.b16 %v114, %v113
  %v147 = vunpack.c.l.b16 %v67
  %v148 = vunpack.c.l.b16 %v68
  %v149 = vunpack.c.l.b16 %v69
  %v150 = vunpack.c.l.b16 %v70
  %v151 = vunpack.c.l.b16 %v71
  %v152 = vunpack.c.l.b16 %v72
  %v153 = vunpack.c.l.b16 %v73
  %v154 = vunpack.c.l.b16 %v74
  %v155 = vunpack.c.l.b16 %v75
  %v156 = vunpack.c.l.b16 %v76
  %v157 = vunpack.c.l.b16 %v77
  %v158 = vunpack.c.l.b16 %v78
  %v159 = vunpack.c.l.b16 %v79
  %v160 = vunpack.c.l.b16 %v80
  %v161 = vunpack.c.l.b16 %v81
  %v162 = vunpack.c.l.b16 %v82
  %v163 = vpack.c.b16 %v148, %v147
  %v164 = vpack.c.b16 %v150, %v149
  %v165 = vpack.c.b16 %v152, %v151
  %v166 = vpack.c.b16 %v154, %v153
  %v167 = vpack.c.b16 %v156, %v155
  %v168 = vpack.c.b16 %v158, %v157
  %v169 = vpack.c.b16 %v160, %v159
  %v170 = vpack.c.b16 %v162, %v161
  %179 = vmatprep.subr.bf16.mxu0 0
  %180 = vmatpush1.bf16.msra.mxu0 %v163
  %181 = vmatprep.subr.bf16.mxu0 0
  %182 = vmatpush1.bf16.msra.mxu0 %v164
  %183 = vmatprep.subr.bf16.mxu0 0
  %184 = vmatpush1.bf16.msra.mxu0 %v165
  %185 = vmatprep.subr.bf16.mxu0 0
  %186 = vmatpush1.bf16.msra.mxu0 %v166
  %187 = vmatprep.subr.bf16.mxu0 0
  %188 = vmatpush1.bf16.msra.mxu0 %v167
  %189 = vmatprep.subr.bf16.mxu0 0
  %190 = vmatpush1.bf16.msra.mxu0 %v168
  %191 = vmatprep.subr.bf16.mxu0 0
  %192 = vmatpush1.bf16.msra.mxu0 %v169
  %193 = vmatprep.subr.bf16.mxu0 0
  %194 = vmatpush1.bf16.msra.mxu0 %v170
  %195 = vmatprep.subr.bf16.mxu0 0
  %196 = vmatpush1.bf16.msra.mxu0 0
  %197 = vmatprep.subr.bf16.mxu0 0
  %198 = vmatpush1.bf16.msra.mxu0 0
  %199 = vmatprep.subr.bf16.mxu0 0
  %200 = vmatpush1.bf16.msra.mxu0 0
  %201 = vmatprep.subr.bf16.mxu0 0
  %202 = vmatpush1.bf16.msra.mxu0 0
  %203 = vmatprep.subr.bf16.mxu0 0
  %204 = vmatpush1.bf16.msra.mxu0 0
  %205 = vmatprep.subr.bf16.mxu0 0
  %206 = vmatpush1.bf16.msra.mxu0 0
  %207 = vmatprep.subr.bf16.mxu0 0
  %208 = vmatpush1.bf16.msra.mxu0 0
  %209 = vmatprep.subr.bf16.mxu0 0
  %210 = vmatpush1.bf16.msra.mxu0 0
  %211 = vmatprep.mubr.bf16.mxu0 0
  %212 = vmatmul.mubr.bf16.gmra.mrb[0].mxu0 %v115
  %v213 = vpop.f32.mrb[0].mxu0
  %v214 = vadd.f32 0.0, %v213
  %v215 = vpop.f32.mrb[0].mxu0
  %v216 = vpop.f32.mrb[0].mxu0
  %v217 = vadd.f32 0.0, %v216
  %v218 = vpop.f32.mrb[0].mxu0
  %219 = vmatprep.mubr.bf16.mxu0 0
  %220 = vmatmul.mubr.bf16.gmra.mrb[0].mxu0 %v116
  %v221 = vpop.f32.mrb[0].mxu0
  %v222 = vadd.f32 0.0, %v221
  %v223 = vpop.f32.mrb[0].mxu0
  %v224 = vpop.f32.mrb[0].mxu0
  %v225 = vadd.f32 0.0, %v224
  %v226 = vpop.f32.mrb[0].mxu0
  %227 = vmatprep.mubr.bf16.mxu0 0
  %228 = vmatmul.mubr.bf16.gmra.mrb[0].mxu0 %v117
  %v229 = vpop.f32.mrb[0].mxu0
  %v230 = vadd.f32 0.0, %v229
  %v231 = vpop.f32.mrb[0].mxu0
  %v232 = vpop.f32.mrb[0].mxu0
  %v233 = vadd.f32 0.0, %v232
  %v234 = vpop.f32.mrb[0].mxu0
  %235 = vmatprep.mubr.bf16.mxu0 0
  %236 = vmatmul.mubr.bf16.gmra.mrb[0].mxu0 %v118
  %v237 = vpop.f32.mrb[0].mxu0
  %v238 = vadd.f32 0.0, %v237
  %v239 = vpop.f32.mrb[0].mxu0
  %v240 = vpop.f32.mrb[0].mxu0
  %v241 = vadd.f32 0.0, %v240
  %v242 = vpop.f32.mrb[0].mxu0
  %243 = vmatprep.mubr.bf16.mxu0 0
  %244 = vmatmul.mubr.bf16.gmra.mrb[0].mxu0 %v119
  %v245 = vpop.f32.mrb[0].mxu0
  %v246 = vadd.f32 0.0, %v245
  %v247 = vpop.f32.mrb[0].mxu0
  %v248 = vpop.f32.mrb[0].mxu0
  %v249 = vadd.f32 0.0, %v248
  %v250 = vpop.f32.mrb[0].mxu0
  %251 = vmatprep.mubr.bf16.mxu0 0
  %252 = vmatmul.mubr.bf16.gmra.mrb[0].mxu0 %v120
  %v253 = vpop.f32.mrb[0].mxu0
  %v254 = vadd.f32 0.0, %v253
  %v255 = vpop.f32.mrb[0].mxu0
  %v256 = vpop.f32.mrb[0].mxu0
  %v257 = vadd.f32 0.0, %v256
  %v258 = vpop.f32.mrb[0].mxu0
  %259 = vmatprep.mubr.bf16.mxu0 0
  %260 = vmatmul.mubr.bf16.gmra.mrb[0].mxu0 %v121
  %v261 = vpop.f32.mrb[0].mxu0
  %v262 = vadd.f32 0.0, %v261
  %v263 = vpop.f32.mrb[0].mxu0
  %v264 = vpop.f32.mrb[0].mxu0
  %v265 = vadd.f32 0.0, %v264
  %v266 = vpop.f32.mrb[0].mxu0
  %267 = vmatprep.mubr.bf16.mxu0 0
  %268 = vmatmul.mubr.bf16.gmra.mrb[0].mxu0 %v122
  %v269 = vpop.f32.mrb[0].mxu0
  %v270 = vadd.f32 0.0, %v269
  %v271 = vpop.f32.mrb[0].mxu0
  %v272 = vpop.f32.mrb[0].mxu0
  %v273 = vadd.f32 0.0, %v272
  %v274 = vpop.f32.mrb[0].mxu0
  %275 = vdwg.mxu0
  %v276 = vadd.f32 %v35, %v214
  %v277 = vadd.f32 %v36, %v217
  %v278 = vadd.f32 %v37, %v222
  %v279 = vadd.f32 %v38, %v225
  %v280 = vadd.f32 %v39, %v230
  %v281 = vadd.f32 %v40, %v233
  %v282 = vadd.f32 %v41, %v238
  %v283 = vadd.f32 %v42, %v241
  %v284 = vadd.f32 %v43, %v246
  %v285 = vadd.f32 %v44, %v249
  %v286 = vadd.f32 %v45, %v254
  %v287 = vadd.f32 %v46, %v257
  %v288 = vadd.f32 %v47, %v262
  %v289 = vadd.f32 %v48, %v265
  %v290 = vadd.f32 %v49, %v270
  %v291 = vadd.f32 %v50, %v273
  %292 = vst [vmem:[#allocation2] sm:$0xff] %v276
  %293 = vst [vmem:[#allocation2 + $0x8] sm:$0xff] %v277
  %294 = vst [vmem:[#allocation2 + $0x10] sm:$0xff] %v278
  %295 = vst [vmem:[#allocation2 + $0x18] sm:$0xff] %v279
  %296 = vst [vmem:[#allocation2 + $0x20] sm:$0xff] %v280
  %297 = vst [vmem:[#allocation2 + $0x28] sm:$0xff] %v281
  %298 = vst [vmem:[#allocation2 + $0x30] sm:$0xff] %v282
  %299 = vst [vmem:[#allocation2 + $0x38] sm:$0xff] %v283
  %300 = vst [vmem:[#allocation2 + $0x40] sm:$0xff] %v284
  %301 = vst [vmem:[#allocation2 + $0x48] sm:$0xff] %v285
  %302 = vst [vmem:[#allocation2 + $0x50] sm:$0xff] %v286
  %303 = vst [vmem:[#allocation2 + $0x58] sm:$0xff] %v287
  %304 = vst [vmem:[#allocation2 + $0x60] sm:$0xff] %v288
  %305 = vst [vmem:[#allocation2 + $0x68] sm:$0xff] %v289
  %306 = vst [vmem:[#allocation2 + $0x70] sm:$0xff] %v290
  %307 = vst [vmem:[#allocation2 + $0x78] sm:$0xff] %v291
  // Predicated region
  $region14: #{discrim_block_forward.6} parent=0 // pred_check
    %p308 = pneg %p15
  $region15: #{discrim_block_forward.6} parent=0 // pred_check_branch
    %310 = sbr.rel (%p308) target = $region17
  $region16: #{discrim_block_forward.6} parent=0 // pred_region
    %v311 = vld [vmem:[#allocation2] sm:$0xff]
    %v312 = vld [vmem:[#allocation2 + $0x8] sm:$0xff]
    %v313 = vld [vmem:[#allocation2 + $0x10] sm:$0xff]
    %v314 = vld [vmem:[#allocation2 + $0x18] sm:$0xff]
    %v315 = vld [vmem:[#allocation2 + $0x20] sm:$0xff]
    %v316 = vld [vmem:[#allocation2 + $0x28] sm:$0xff]
    %v317 = vld [vmem:[#allocation2 + $0x30] sm:$0xff]
    %v318 = vld [vmem:[#allocation2 + $0x38] sm:$0xff]
    %v319 = vld [vmem:[#allocation2 + $0x40] sm:$0xff]
    %v320 = vld [vmem:[#allocation2 + $0x48] sm:$0xff]
    %v321 = vld [vmem:[#allocation2 + $0x50] sm:$0xff]
    %v322 = vld [vmem:[#allocation2 + $0x58] sm:$0xff]
    %v323 = vld [vmem:[#allocation2 + $0x60] sm:$0xff]
    %v324 = vld [vmem:[#allocation2 + $0x68] sm:$0xff]
    %v325 = vld [vmem:[#allocation2 + $0x70] sm:$0xff]
    %v326 = vld [vmem:[#allocation2 + $0x78] sm:$0xff]
    %v327 = vpack.c.bf16 %v312, %v311
    %v328 = vpack.c.bf16 %v314, %v313
    %v329 = vpack.c.bf16 %v316, %v315
    %v330 = vpack.c.bf16 %v318, %v317
    %v331 = vpack.c.bf16 %v320, %v319
    %v332 = vpack.c.bf16 %v322, %v321
    %v333 = vpack.c.bf16 %v324, %v323
    %v334 = vpack.c.bf16 %v326, %v325
    %v343 = vunpack.c.l.b16 %v327
    %v344 = vunpack.c.h.b16 %v327
    %v345 = vunpack.c.l.b16 %v328
    %v346 = vunpack.c.h.b16 %v328
    %v347 = vunpack.c.l.b16 %v329
    %v348 = vunpack.c.h.b16 %v329
    %v349 = vunpack.c.l.b16 %v330
    %v350 = vunpack.c.h.b16 %v330
    %v351 = vunpack.c.l.b16 %v331
    %v352 = vunpack.c.h.b16 %v331
    %v353 = vunpack.c.l.b16 %v332
    %v354 = vunpack.c.h.b16 %v332
    %v355 = vunpack.c.l.b16 %v333
    %v356 = vunpack.c.h.b16 %v333
    %v357 = vunpack.c.l.b16 %v334
    %v358 = vunpack.c.h.b16 %v334
    %v359 = vpack.c.b16 %v343, %v343
    %v360 = vpack.c.b16 %v344, %v344
    %v361 = vpack.c.b16 %v345, %v345
    %v362 = vpack.c.b16 %v346, %v346
    %v363 = vpack.c.b16 %v347, %v347
    %v364 = vpack.c.b16 %v348, %v348
    %v365 = vpack.c.b16 %v349, %v349
    %v366 = vpack.c.b16 %v350, %v350
    %v367 = vpack.c.b16 %v351, %v351
    %v368 = vpack.c.b16 %v352, %v352
    %v369 = vpack.c.b16 %v353, %v353
    %v370 = vpack.c.b16 %v354, %v354
    %v371 = vpack.c.b16 %v355, %v355
    %v372 = vpack.c.b16 %v356, %v356
    %v373 = vpack.c.b16 %v357, %v357
    %v374 = vpack.c.b16 %v358, %v358
    %391 = vst [vmem:[%s2] sm:$0xf] %v359
    %392 = vst [vmem:[%s2 + $0x4] sm:$0xf] %v360
    %393 = vst [vmem:[%s2 + $0x8] sm:$0xf] %v361
    %394 = vst [vmem:[%s2 + $0xc] sm:$0xf] %v362
    %395 = vst [vmem:[%s2 + $0x10] sm:$0xf] %v363
    %396 = vst [vmem:[%s2 + $0x14] sm:$0xf] %v364
    %397 = vst [vmem:[%s2 + $0x18] sm:$0xf] %v365
    %398 = vst [vmem:[%s2 + $0x1c] sm:$0xf] %v366
    %399 = vst [vmem:[%s2 + $0x20] sm:$0xf] %v367
    %400 = vst [vmem:[%s2 + $0x24] sm:$0xf] %v368
    %401 = vst [vmem:[%s2 + $0x28] sm:$0xf] %v369
    %402 = vst [vmem:[%s2 + $0x2c] sm:$0xf] %v370
    %403 = vst [vmem:[%s2 + $0x30] sm:$0xf] %v371
    %404 = vst [vmem:[%s2 + $0x34] sm:$0xf] %v372
    %405 = vst [vmem:[%s2 + $0x38] sm:$0xf] %v373
    %406 = vst [vmem:[%s2 + $0x3c] sm:$0xf] %v374
    %v407 = vadd.f32 %v311, %v312
    %v408 = vadd.f32 %v407, %v313
    %v409 = vadd.f32 %v408, %v314
    %v410 = vadd.f32 %v409, %v315
    %v411 = vadd.f32 %v410, %v316
    %v412 = vadd.f32 %v411, %v317
    %v413 = vadd.f32 %v412, %v318
    %v414 = vadd.f32 %v413, %v319
    %v415 = vadd.f32 %v414, %v320
    %v416 = vadd.f32 %v415, %v321
    %v417 = vadd.f32 %v416, %v322
    %v418 = vadd.f32 %v417, %v323
    %v419 = vadd.f32 %v418, %v324
    %v420 = vadd.f32 %v419, %v325
    %v421 = vadd.f32 %v420, %v326
    %v422 = vrot.slane %v421, 4
    %v423 = vadd.f32 %v421, %v422
    %v424 = vrot.slane %v423, 2
    %v425 = vadd.f32 %v423, %v424
    %v426 = vrot.slane %v425, 1
    %v427 = vadd.f32 %v425, %v426
    %428 = vst [vmem:[%s3] sm:$0x1] %v427
    %v429 = vmul.f32 %v311, %v311
    %v430 = vmul.f32 %v312, %v312
    %v431 = vmul.f32 %v313, %v313
    %v432 = vmul.f32 %v314, %v314
    %v433 = vmul.f32 %v315, %v315
    %v434 = vmul.f32 %v316, %v316
    %v435 = vmul.f32 %v317, %v317
    %v436 = vmul.f32 %v318, %v318
    %v437 = vmul.f32 %v319, %v319
    %v438 = vmul.f32 %v320, %v320
    %v439 = vmul.f32 %v321, %v321
    %v440 = vmul.f32 %v322, %v322
    %v441 = vmul.f32 %v323, %v323
    %v442 = vmul.f32 %v324, %v324
    %v443 = vmul.f32 %v325, %v325
    %v444 = vmul.f32 %v326, %v326
    %v445 = vadd.f32 %v429, %v430
    %v446 = vadd.f32 %v445, %v431
    %v447 = vadd.f32 %v446, %v432
    %v448 = vadd.f32 %v447, %v433
    %v449 = vadd.f32 %v448, %v434
    %v450 = vadd.f32 %v449, %v435
    %v451 = vadd.f32 %v450, %v436
    %v452 = vadd.f32 %v451, %v437
    %v453 = vadd.f32 %v452, %v438
    %v454 = vadd.f32 %v453, %v439
    %v455 = vadd.f32 %v454, %v440
    %v456 = vadd.f32 %v455, %v441
    %v457 = vadd.f32 %v456, %v442
    %v458 = vadd.f32 %v457, %v443
    %v459 = vadd.f32 %v458, %v444
    %v460 = vrot.slane %v459, 4
    %v461 = vadd.f32 %v459, %v460
    %v462 = vrot.slane %v461, 2
    %v463 = vadd.f32 %v461, %v462
    %v464 = vrot.slane %v463, 1
    %v465 = vadd.f32 %v463, %v464
    %466 = vst [vmem:[%s4] sm:$0x1] %v465
  $region17: #{discrim_block_forward.6} parent=0 // pred_fallthru
    _
  // Predicated region
  $region18: #{discrim_block_forward.6} parent=0 // pred_check
    _
  $region19: #{discrim_block_forward.6} parent=0 // pred_check_branch
    %468 = sbr.rel (0) target = $region21
  $region20: #{discrim_block_forward.6} parent=0 // pred_region
    _
  $region21: #{discrim_block_forward.6} parent=0 // pred_fallthru
    _
  // Predicated region
  $region22: #{discrim_block_forward.6} parent=0 // pred_check
    _
  $region23: #{discrim_block_forward.6} parent=0 // pred_check_branch
    %470 = sbr.rel (0) target = $region25
  $region24: #{discrim_block_forward.6} parent=0 // pred_region
    _
  $region25: #{discrim_block_forward.6} parent=0 // pred_fallthru
    _
  // Predicated region
  $region26: #{discrim_block_forward.6} parent=0 // pred_check
    _
  $region27: #{discrim_block_forward.6} parent=0 // pred_check_branch
    %472 = sbr.rel (0) target = $region29
  $region28: #{discrim_block_forward.6} parent=0 // pred_region
    _
  $region29: #{discrim_block_forward.6} parent=0 // pred_fallthru
    _
  // Predicated region
  $region30: #{discrim_block_forward.6} parent=0 // pred_check
    _
  $region31: #{discrim_block_forward.6} parent=0 // pred_check_branch
    %474 = sbr.rel (0) target = $region33
  $region32: #{discrim_block_forward.6} parent=0 // pred_region
    _
  $region33: #{discrim_block_forward.6} parent=0 // pred_fallthru
    _
  // Predicated region
  $region34: #{discrim_block_forward.6} parent=0 // pred_check
    _
  $region35: #{discrim_block_forward.6} parent=0 // pred_check_branch
    %476 = sbr.rel (0) target = $region37
  $region36: #{discrim_block_forward.6} parent=0 // pred_region
    _
  $region37: #{discrim_block_forward.6} parent=0 // pred_fallthru
    _
  // Predicated region
  $region38: #{discrim_block_forward.6} parent=0 // pred_check
    _
  $region39: #{discrim_block_forward.6} parent=0 // pred_check_branch
    %478 = sbr.rel (0) target = $region41
  $region40: #{discrim_block_forward.6} parent=0 // pred_region
    _
  $region41: #{discrim_block_forward.6} parent=0 // pred_fallthru
    _

// kernel: discrim_block_forward.7
$region0: #{discrim_block_forward.7}
  #allocation0 [shape = 'u32[]', space=smem, size = 0x4, offset = 0x4, fixed_abs, tag = 'smem constant byte address 0x4 - core index']
  #allocation1 [shape = 'u32[144,128]{1,0:T(1,128)}', space=vmem, size = 0x12000, scoped, tag = 'internal scratch']
  %s0 = inlined_call_operand.vmem [shape: bf16[128,128], index: 0, kind: input, shape index: {}]
  %s1 = inlined_call_operand.vmem [shape: f32[1,128], index: 1, kind: input, shape index: {}]
  %s2 = inlined_call_operand.vmem [shape: f32[1,128], index: 2, kind: input, shape index: {}]
  %s3 = inlined_call_operand.vmem [shape: f32[128,128], index: 3, kind: output, shape index: {}]
  %s4 = sld [smem:[#allocation0]]
  $region22: #{discrim_block_forward.7} parent=0
    _
  %s6 = ssub.s32 1, %s4
  %s7 = scalar_select 0, %s6, %s4
  // Predicated region
  $region2: #{discrim_block_forward.7} parent=0 // pred_check
    _
  $region3: #{discrim_block_forward.7} parent=0 // pred_check_branch
    %9 = sbr.rel (0) target = $region5
  $region4: #{discrim_block_forward.7} parent=0 // pred_region
    _
  $region5: #{discrim_block_forward.7} parent=0 // pred_fallthru
    _
  // Predicated region
  $region6: #{discrim_block_forward.7} parent=0 // pred_check
    _
  $region7: #{discrim_block_forward.7} parent=0 // pred_check_branch
    %11 = sbr.rel (0) target = $region9
  $region8: #{discrim_block_forward.7} parent=0 // pred_region
    _
  $region9: #{discrim_block_forward.7} parent=0 // pred_fallthru
    _
  // Predicated region
  $region10: #{discrim_block_forward.7} parent=0 // pred_check
    _
  $region11: #{discrim_block_forward.7} parent=0 // pred_check_branch
    %13 = sbr.rel (0) target = $region13
  $region12: #{discrim_block_forward.7} parent=0 // pred_region
    _
  $region13: #{discrim_block_forward.7} parent=0 // pred_fallthru
    _
  %v14 = vld [vmem:[%s0] sm:$0xf]
  %v15 = vld [vmem:[%s0 + $0x4] sm:$0xf]
  %v16 = vld [vmem:[%s0 + $0x8] sm:$0xf]
  %v17 = vld [vmem:[%s0 + $0xc] sm:$0xf]
  %v18 = vld [vmem:[%s0 + $0x10] sm:$0xf]
  %v19 = vld [vmem:[%s0 + $0x14] sm:$0xf]
  %v20 = vld [vmem:[%s0 + $0x18] sm:$0xf]
  %v21 = vld [vmem:[%s0 + $0x1c] sm:$0xf]
  %v22 = vld [vmem:[%s0 + $0x20] sm:$0xf]
  %v23 = vld [vmem:[%s0 + $0x24] sm:$0xf]
  %v24 = vld [vmem:[%s0 + $0x28] sm:$0xf]
  %v25 = vld [vmem:[%s0 + $0x2c] sm:$0xf]
  %v26 = vld [vmem:[%s0 + $0x30] sm:$0xf]
  %v27 = vld [vmem:[%s0 + $0x34] sm:$0xf]
  %v28 = vld [vmem:[%s0 + $0x38] sm:$0xf]
  %v29 = vld [vmem:[%s0 + $0x3c] sm:$0xf]
  %v30 = vunpack.c.l.bf16 %v14
  %v31 = vunpack.c.l.bf16 %v15
  %v32 = vunpack.c.l.bf16 %v16
  %v33 = vunpack.c.l.bf16 %v17
  %v34 = vunpack.c.l.bf16 %v18
  %v35 = vunpack.c.l.bf16 %v19
  %v36 = vunpack.c.l.bf16 %v20
  %v37 = vunpack.c.l.bf16 %v21
  %v38 = vunpack.c.l.bf16 %v22
  %v39 = vunpack.c.l.bf16 %v23
  %v40 = vunpack.c.l.bf16 %v24
  %v41 = vunpack.c.l.bf16 %v25
  %v42 = vunpack.c.l.bf16 %v26
  %v43 = vunpack.c.l.bf16 %v27
  %v44 = vunpack.c.l.bf16 %v28
  %v45 = vunpack.c.l.bf16 %v29
  %v46 = vld [vmem:[%s1] sm:$0x1]
  %v48 = vlaneseq
  %v49 = vshrl.u32 %v48, 7
  %v50 = vsub.s32 0, %v49
  %v51 = vrot.slane %v46, %v50
  %v53 = vmul.f32 %v30, %v51
  %v54 = vmul.f32 %v31, %v51
  %v55 = vmul.f32 %v32, %v51
  %v56 = vmul.f32 %v33, %v51
  %v57 = vmul.f32 %v34, %v51
  %v58 = vmul.f32 %v35, %v51
  %v59 = vmul.f32 %v36, %v51
  %v60 = vmul.f32 %v37, %v51
  %v61 = vmul.f32 %v38, %v51
  %v62 = vmul.f32 %v39, %v51
  %v63 = vmul.f32 %v40, %v51
  %v64 = vmul.f32 %v41, %v51
  %v65 = vmul.f32 %v42, %v51
  %v66 = vmul.f32 %v43, %v51
  %v67 = vmul.f32 %v44, %v51
  %v68 = vmul.f32 %v45, %v51
  %v69 = vld [vmem:[%s2] sm:$0x1]
  %v71 = vlaneseq
  %v72 = vshrl.u32 %v71, 7
  %v73 = vsub.s32 0, %v72
  %v74 = vrot.slane %v69, %v73
  %v76 = vadd.f32 %v53, %v74
  %v77 = vadd.f32 %v54, %v74
  %v78 = vadd.f32 %v55, %v74
  %v79 = vadd.f32 %v56, %v74
  %v80 = vadd.f32 %v57, %v74
  %v81 = vadd.f32 %v58, %v74
  %v82 = vadd.f32 %v59, %v74
  %v83 = vadd.f32 %v60, %v74
  %v84 = vadd.f32 %v61, %v74
  %v85 = vadd.f32 %v62, %v74
  %v86 = vadd.f32 %v63, %v74
  %v87 = vadd.f32 %v64, %v74
  %v88 = vadd.f32 %v65, %v74
  %v89 = vadd.f32 %v66, %v74
  %v90 = vadd.f32 %v67, %v74
  %v91 = vadd.f32 %v68, %v74
  %v92 = vmul.f32 %v76, 0.01
  %v93 = vmul.f32 %v77, 0.01
  %v94 = vmul.f32 %v78, 0.01
  %v95 = vmul.f32 %v79, 0.01
  %v96 = vmul.f32 %v80, 0.01
  %v97 = vmul.f32 %v81, 0.01
  %v98 = vmul.f32 %v82, 0.01
  %v99 = vmul.f32 %v83, 0.01
  %v100 = vmul.f32 %v84, 0.01
  %v101 = vmul.f32 %v85, 0.01
  %v102 = vmul.f32 %v86, 0.01
  %v103 = vmul.f32 %v87, 0.01
  %v104 = vmul.f32 %v88, 0.01
  %v105 = vmul.f32 %v89, 0.01
  %v106 = vmul.f32 %v90, 0.01
  %v107 = vmul.f32 %v91, 0.01
  %v108 = vmax.f32 %v76, %v92
  %v109 = vmax.f32 %v77, %v93
  %v110 = vmax.f32 %v78, %v94
  %v111 = vmax.f32 %v79, %v95
  %v112 = vmax.f32 %v80, %v96
  %v113 = vmax.f32 %v81, %v97
  %v114 = vmax.f32 %v82, %v98
  %v115 = vmax.f32 %v83, %v99
  %v116 = vmax.f32 %v84, %v100
  %v117 = vmax.f32 %v85, %v101
  %v118 = vmax.f32 %v86, %v102
  %v119 = vmax.f32 %v87, %v103
  %v120 = vmax.f32 %v88, %v104
  %v121 = vmax.f32 %v89, %v105
  %v122 = vmax.f32 %v90, %v106
  %v123 = vmax.f32 %v91, %v107
  %124 = vst [vmem:[%s3] sm:$0xff] %v108
  %125 = vst [vmem:[%s3 + $0x8] sm:$0xff] %v109
  %126 = vst [vmem:[%s3 + $0x10] sm:$0xff] %v110
  %127 = vst [vmem:[%s3 + $0x18] sm:$0xff] %v111
  %128 = vst [vmem:[%s3 + $0x20] sm:$0xff] %v112
  %129 = vst [vmem:[%s3 + $0x28] sm:$0xff] %v113
  %130 = vst [vmem:[%s3 + $0x30] sm:$0xff] %v114
  %131 = vst [vmem:[%s3 + $0x38] sm:$0xff] %v115
  %132 = vst [vmem:[%s3 + $0x40] sm:$0xff] %v116
  %133 = vst [vmem:[%s3 + $0x48] sm:$0xff] %v117
  %134 = vst [vmem:[%s3 + $0x50] sm:$0xff] %v118
  %135 = vst [vmem:[%s3 + $0x58] sm:$0xff] %v119
  %136 = vst [vmem:[%s3 + $0x60] sm:$0xff] %v120
  %137 = vst [vmem:[%s3 + $0x68] sm:$0xff] %v121
  %138 = vst [vmem:[%s3 + $0x70] sm:$0xff] %v122
  %139 = vst [vmem:[%s3 + $0x78] sm:$0xff] %v123
  // Predicated region
  $region14: #{discrim_block_forward.7} parent=0 // pred_check
    _
  $region15: #{discrim_block_forward.7} parent=0 // pred_check_branch
    %141 = sbr.rel (0) target = $region17
  $region16: #{discrim_block_forward.7} parent=0 // pred_region
    _
  $region17: #{discrim_block_forward.7} parent=0 // pred_fallthru
    _
  // Predicated region
  $region18: #{discrim_block_forward.7} parent=0 // pred_check
    _
  $region19: #{discrim_block_forward.7} parent=0 // pred_check_branch
    %143 = sbr.rel (0) target = $region21
  $region20: #{discrim_block_forward.7} parent=0 // pred_region
    _
  $region21: #{discrim_block_forward.7} parent=0 // pred_fallthru
    _

</llo_original>
